<compile_context>
chip_gen: v5e
topology: v5e:2x2
jax: 0.10.0
libtpu: 0.0.40
codegen_flags: <defaults>
</compile_context>

<pallas_src>
import jax
import jax.numpy as jnp
import numpy as np
from jax.experimental import pallas as pl
from jax.experimental.pallas import tpu as pltpu


def hybrid_kernel(x_ref,        # (T, B_pad, D_pad)        bf16, time-major input
                  w_ih_ref,     # (D_pad, 4*H_pad)         bf16, LSTM input->gates
                  w_hh_ref,     # (H_pad, 4*H_pad)         bf16, LSTM hidden->gates
                  b_lstm_ref,   # (1, 4*H_pad)             f32,  b_ih + b_hh
                  wr_ih_ref,    # (H_pad, H_pad)           bf16, RNN input->hidden
                  wr_hh_ref,    # (H_pad, H_pad)           bf16, RNN hidden->hidden
                  b_rnn_ref,    # (1, H_pad)               f32,  b_ih + b_hh
                  w_fc_ref,     # (H_pad, O_pad)           bf16, final linear
                  b_fc_ref,     # (1, O_pad)               f32
                  out_ref,      # (B_pad, O_pad)           f32 output
                  xg_ref,       # VMEM scratch (T, B_pad, 4*H_pad) f32: x@W_ih + b_lstm
                  hs_ref,       # VMEM scratch (T, B_pad, H_pad)   f32: LSTM hidden states
                  rg_ref):      # VMEM scratch (T, B_pad, H_pad)   f32: hs@Wr_ih + b_rnn
    T, B, D = x_ref.shape
    H = wr_hh_ref.shape[0]

    # ---- phase 0: batched input projection for all timesteps (one big MXU matmul) ----
    x2 = x_ref[...].reshape(T * B, D)                               # bf16 (T*B, D)
    xg = jnp.dot(x2, w_ih_ref[...], preferred_element_type=jnp.float32)
    xg_ref[...] = (xg + b_lstm_ref[...]).reshape(T, B, 4 * H)

    zeros = jnp.zeros((B, H), jnp.float32)

    # ---- phase 1: LSTM recurrence (only h @ W_hh on the critical path) ----
    w_hh = w_hh_ref[...]

    def lstm_step(t, carry):
        h, c = carry
        gates = xg_ref[t] + jnp.dot(h.astype(jnp.bfloat16), w_hh,
                                    preferred_element_type=jnp.float32)
        # PyTorch gate order i, f, g, o; slices are lane-aligned (H is a 128-multiple).
        i_g = jax.nn.sigmoid(gates[:, 0 * H:1 * H])
        f_g = jax.nn.sigmoid(gates[:, 1 * H:2 * H])
        g_g = jnp.tanh(gates[:, 2 * H:3 * H])
        o_g = jax.nn.sigmoid(gates[:, 3 * H:4 * H])
        c = f_g * c + i_g * g_g
        h = o_g * jnp.tanh(c)
        hs_ref[t] = h
        return h, c

    jax.lax.fori_loop(0, T, lstm_step, (zeros, zeros), unroll=True)

    # ---- phase 1.5: batched RNN input projection over all timesteps ----
    hs2 = hs_ref[...].reshape(T * B, H).astype(jnp.bfloat16)
    rg = jnp.dot(hs2, wr_ih_ref[...], preferred_element_type=jnp.float32)
    rg_ref[...] = (rg + b_rnn_ref[...]).reshape(T, B, H)

    # ---- phase 2: vanilla RNN (tanh) recurrence ----
    wr_hh = wr_hh_ref[...]

    def rnn_step(t, h):
        pre = rg_ref[t] + jnp.dot(h.astype(jnp.bfloat16), wr_hh,
                                  preferred_element_type=jnp.float32)
        return jnp.tanh(pre)

    h_rnn = jax.lax.fori_loop(0, T, rnn_step, zeros, unroll=True)

    # ---- epilogue: Linear + Sigmoid on the last RNN hidden state (lane-dense output) ----
    logits = jnp.dot(h_rnn.astype(jnp.bfloat16), w_fc_ref[...],
                     preferred_element_type=jnp.float32) + b_fc_ref[...]
    out_ref[...] = jax.nn.sigmoid(logits)


def _round_up(n, m):
    return ((n + m - 1) // m) * m


def lstm_rnn_hybrid(x, params):
    """x: (B, T, D) float32; returns (B, output_size) float32."""
    B, T, D = x.shape
    H = params["wr_hh"].shape[0]
    O = params["w_fc"].shape[1]

    B_pad = _round_up(B, 8)       # sublane alignment
    D_pad = _round_up(D, 128)     # lane alignment (matmul K)
    H_pad = _round_up(H, 128)
    O_pad = _round_up(O, 128)

    # time-major, zero-padded, bf16 input
    x_tm = jnp.transpose(x, (1, 0, 2))                                    # (T, B, D)
    x_tm = jnp.pad(x_tm, ((0, 0), (0, B_pad - B), (0, D_pad - D)))
    x_tm = x_tm.astype(jnp.bfloat16)

    def pad_mat(w, r_pad, c_pad):
        return jnp.pad(w, ((0, r_pad - w.shape[0]), (0, c_pad - w.shape[1])))

    def pad_gate_mat(w, r_pad):   # (K, 4H) -> (r_pad, 4*H_pad), padded per gate block
        K = w.shape[0]
        w4 = w.reshape(K, 4, H)
        w4 = jnp.pad(w4, ((0, r_pad - K), (0, 0), (0, H_pad - H)))
        return w4.reshape(r_pad, 4 * H_pad)

    def pad_gate_bias(b):         # (1, 4H) -> (1, 4*H_pad)
        b4 = b.reshape(1, 4, H)
        b4 = jnp.pad(b4, ((0, 0), (0, 0), (0, H_pad - H)))
        return b4.reshape(1, 4 * H_pad)

    w_ih = pad_gate_mat(params["w_ih"], D_pad).astype(jnp.bfloat16)
    w_hh = pad_gate_mat(params["w_hh"], H_pad).astype(jnp.bfloat16)
    b_lstm = pad_gate_bias(params["b_lstm"])                              # f32
    wr_ih = pad_mat(params["wr_ih"], H_pad, H_pad).astype(jnp.bfloat16)
    wr_hh = pad_mat(params["wr_hh"], H_pad, H_pad).astype(jnp.bfloat16)
    b_rnn = pad_mat(params["b_rnn"], 1, H_pad)                            # f32
    w_fc = pad_mat(params["w_fc"], H_pad, O_pad).astype(jnp.bfloat16)
    b_fc = pad_mat(params["b_fc"], 1, O_pad)                              # f32

    vmem_spec = pl.BlockSpec(memory_space=pltpu.MemorySpace.VMEM)

    out_pad = pl.pallas_call(
        hybrid_kernel,
        out_shape=jax.ShapeDtypeStruct((B_pad, O_pad), jnp.float32),
        in_specs=[vmem_spec] * 9,
        out_specs=vmem_spec,
        scratch_shapes=[
            pltpu.VMEM((T, B_pad, 4 * H_pad), jnp.float32),   # xg: precomputed gate inputs
            pltpu.VMEM((T, B_pad, H_pad), jnp.float32),       # hs: all LSTM hidden states
            pltpu.VMEM((T, B_pad, H_pad), jnp.float32),       # rg: precomputed RNN inputs
        ],
        # Explicit VMEM budget: actual usage here is < 1 MiB; 32 MiB is safe on
        # v5e/v6e (128 MiB physical) and v7x (64 MiB physical).
        compiler_params=pltpu.CompilerParams(vmem_limit_bytes=32 * 1024 * 1024),
    )(x_tm, w_ih, w_hh, b_lstm, wr_ih, wr_hh, b_rnn, w_fc, b_fc)

    return out_pad[:B, :O]


def init_params(key, input_size, hidden_size, output_size):
    """Deterministic init mimicking PyTorch's U(-1/sqrt(H), 1/sqrt(H))."""
    H, D, O = hidden_size, input_size, output_size
    ks = jax.random.split(key, 12)
    s = 1.0 / np.sqrt(H)
    u = lambda k, shape: jax.random.uniform(k, shape, jnp.float32, -s, s)
    return {
        # LSTM (weights pre-transposed to (in, out)); biases b_ih + b_hh pre-summed.
        "w_ih": u(ks[0], (D, 4 * H)),
        "w_hh": u(ks[1], (H, 4 * H)),
        "b_lstm": u(ks[2], (1, 4 * H)) + u(ks[3], (1, 4 * H)),
        # RNN
        "wr_ih": u(ks[4], (H, H)),
        "wr_hh": u(ks[5], (H, H)),
        "b_rnn": u(ks[6], (1, H)) + u(ks[7], (1, H)),
        # Linear
        "w_fc": u(ks[8], (H, O)),
        "b_fc": u(ks[9], (1, O)),
    }


def reference(x, p):
    """Pure-JAX f32 reference of the PyTorch forward pass."""
    B, T, D = x.shape
    H = p["wr_ih"].shape[0]

    def lstm_step(carry, xt):
        h, c = carry
        gates = xt @ p["w_ih"] + h @ p["w_hh"] + p["b_lstm"][0]
        i = jax.nn.sigmoid(gates[:, :H])
        f = jax.nn.sigmoid(gates[:, H:2 * H])
        g = jnp.tanh(gates[:, 2 * H:3 * H])
        o = jax.nn.sigmoid(gates[:, 3 * H:])
        c = f * c + i * g
        h = o * jnp.tanh(c)
        return (h, c), h

    zeros = jnp.zeros((B, H), jnp.float32)
    (_, _), hs = jax.lax.scan(lstm_step, (zeros, zeros),
                              jnp.transpose(x, (1, 0, 2)))

    def rnn_step(h, ht):
        h = jnp.tanh(ht @ p["wr_ih"] + h @ p["wr_hh"] + p["b_rnn"][0])
        return h, h

    h_last, _ = jax.lax.scan(rnn_step, zeros, hs)
    return jax.nn.sigmoid(h_last @ p["w_fc"] + p["b_fc"][0])


if __name__ == "__main__":
    B, T, D, H, O = 2, 8, 8, 32, 1
    key = jax.random.PRNGKey(0)
    k_x, k_p = jax.random.split(key)
    x = jax.random.normal(k_x, (B, T, D), jnp.float32)
    params = init_params(k_p, D, H, O)

    out = lstm_rnn_hybrid(x, params)
    out = jax.block_until_ready(out)

    ref = jax.block_until_ready(reference(x, params))
    assert out.shape == (B, O)
    # bf16 weights/activations in the MXU path (f32 accumulation) vs. pure-f32 reference.
    assert np.allclose(np.asarray(out), np.asarray(ref), atol=1e-2, rtol=1e-2), \
        f"mismatch: {np.max(np.abs(np.asarray(out) - np.asarray(ref)))}"
    print("KERNEL_OK")
</pallas_src>

<mosaic_0001>
module attributes {stable_mosaic.version = 11 : i64} {
  func.func @hybrid_kernel(%arg0: memref<8x8x128xbf16, #tpu.memory_space<vmem>>, %arg1: memref<128x512xbf16, #tpu.memory_space<vmem>>, %arg2: memref<128x512xbf16, #tpu.memory_space<vmem>>, %arg3: memref<1x512xf32, #tpu.memory_space<vmem>>, %arg4: memref<128x128xbf16, #tpu.memory_space<vmem>>, %arg5: memref<128x128xbf16, #tpu.memory_space<vmem>>, %arg6: memref<1x128xf32, #tpu.memory_space<vmem>>, %arg7: memref<128x128xbf16, #tpu.memory_space<vmem>>, %arg8: memref<1x128xf32, #tpu.memory_space<vmem>>, %arg9: memref<8x128xf32, #tpu.memory_space<vmem>>, %arg10: memref<8x8x512xf32, #tpu.memory_space<vmem>>, %arg11: memref<8x8x128xf32, #tpu.memory_space<vmem>>, %arg12: memref<8x8x128xf32, #tpu.memory_space<vmem>>) attributes {dimension_semantics = [], scalar_prefetch = 0 : i64, scratch_operands = 3 : i64, tpu.core_type = #tpu.core_type<tc>} {
    %c0 = arith.constant 0 : index
    %c0_0 = arith.constant 0 : index
    %c0_1 = arith.constant 0 : index
    %0 = vector.load %arg0[%c0, %c0_0, %c0_1] : memref<8x8x128xbf16, #tpu.memory_space<vmem>>, vector<8x8x128xbf16>
    %1 = vector.shape_cast %0 : vector<8x8x128xbf16> to vector<64x128xbf16>
    %c0_2 = arith.constant 0 : index
    %c0_3 = arith.constant 0 : index
    %2 = vector.load %arg1[%c0_2, %c0_3] : memref<128x512xbf16, #tpu.memory_space<vmem>>, vector<128x512xbf16>
    %cst = arith.constant dense<0.000000e+00> : vector<64x512xf32>
    %3 = tpu.matmul %1, %2, %cst {dimension_numbers = #tpu.dot_dimension_numbers<[1], [0], [0], [1], [0, 0, 1, 1], [], []>} : vector<64x128xbf16>, vector<128x512xbf16>, vector<64x512xf32> -> vector<64x512xf32>
    %c0_4 = arith.constant 0 : index
    %c0_5 = arith.constant 0 : index
    %4 = vector.load %arg3[%c0_4, %c0_5] : memref<1x512xf32, #tpu.memory_space<vmem>>, vector<1x512xf32>
    %5 = vector.broadcast %4 : vector<1x512xf32> to vector<64x512xf32>
    %6 = arith.addf %3, %5 : vector<64x512xf32>
    %7 = vector.shape_cast %6 : vector<64x512xf32> to vector<8x8x512xf32>
    %c0_6 = arith.constant 0 : index
    %c0_7 = arith.constant 0 : index
    %c0_8 = arith.constant 0 : index
    %8 = vector.load %arg10[%c0_6, %c0_7, %c0_8] : memref<8x8x512xf32, #tpu.memory_space<vmem>>, vector<8x8x512xf32>
    tpu.vector_store %arg10[%c0_6, %c0_7, %c0_8], %7 {strides = array<i32>} : memref<8x8x512xf32, #tpu.memory_space<vmem>>, vector<8x8x512xf32>,
    %cst_9 = arith.constant 0.000000e+00 : f32
    %9 = vector.broadcast %cst_9 : f32 to vector<8x128xf32>
    %c0_10 = arith.constant 0 : index
    %c0_11 = arith.constant 0 : index
    %10 = vector.load %arg2[%c0_10, %c0_11] : memref<128x512xbf16, #tpu.memory_space<vmem>>, vector<128x512xbf16>
    %c0_i32 = arith.constant 0 : i32
    %11 = arith.index_cast %c0_i32 : i32 to index
    %c0_12 = arith.constant 0 : index
    %c0_13 = arith.constant 0 : index
    %12 = vector.load %arg10[%11, %c0_12, %c0_13] : memref<8x8x512xf32, #tpu.memory_space<vmem>>, vector<1x8x512xf32>
    %13 = vector.shape_cast %12 : vector<1x8x512xf32> to vector<8x512xf32>
    %14 = arith.truncf %9 : vector<8x128xf32> to vector<8x128xbf16>
    %cst_14 = arith.constant dense<0.000000e+00> : vector<8x512xf32>
    %15 = tpu.matmul %14, %10, %cst_14 {dimension_numbers = #tpu.dot_dimension_numbers<[1], [0], [0], [1], [0, 0, 1, 1], [], []>} : vector<8x128xbf16>, vector<128x512xbf16>, vector<8x512xf32> -> vector<8x512xf32>
    %16 = arith.addf %13, %15 : vector<8x512xf32>
    %17 = vector.extract_strided_slice %16 {offsets = [0, 0], sizes = [8, 128], strides = [1, 1]} : vector<8x512xf32> to vector<8x128xf32>
    %18 = arith.negf %17 : vector<8x128xf32>
    %19 = math.exp %18 : vector<8x128xf32>
    %cst_15 = arith.constant 1.000000e+00 : f32
    %20 = vector.broadcast %cst_15 : f32 to vector<8x128xf32>
    %21 = arith.addf %20, %19 : vector<8x128xf32>
    %22 = arith.divf %20, %21 : vector<8x128xf32>
    %23 = vector.extract_strided_slice %16 {offsets = [0, 128], sizes = [8, 128], strides = [1, 1]} : vector<8x512xf32> to vector<8x128xf32>
    %24 = arith.negf %23 : vector<8x128xf32>
    %25 = math.exp %24 : vector<8x128xf32>
    %cst_16 = arith.constant 1.000000e+00 : f32
    %26 = vector.broadcast %cst_16 : f32 to vector<8x128xf32>
    %27 = arith.addf %26, %25 : vector<8x128xf32>
    %28 = arith.divf %26, %27 : vector<8x128xf32>
    %29 = vector.extract_strided_slice %16 {offsets = [0, 256], sizes = [8, 128], strides = [1, 1]} : vector<8x512xf32> to vector<8x128xf32>
    %30 = math.tanh %29 : vector<8x128xf32>
    %31 = vector.extract_strided_slice %16 {offsets = [0, 384], sizes = [8, 128], strides = [1, 1]} : vector<8x512xf32> to vector<8x128xf32>
    %32 = arith.negf %31 : vector<8x128xf32>
    %33 = math.exp %32 : vector<8x128xf32>
    %cst_17 = arith.constant 1.000000e+00 : f32
    %34 = vector.broadcast %cst_17 : f32 to vector<8x128xf32>
    %35 = arith.addf %34, %33 : vector<8x128xf32>
    %36 = arith.divf %34, %35 : vector<8x128xf32>
    %37 = arith.mulf %28, %9 : vector<8x128xf32>
    %38 = arith.mulf %22, %30 : vector<8x128xf32>
    %39 = arith.addf %37, %38 : vector<8x128xf32>
    %40 = math.tanh %39 : vector<8x128xf32>
    %41 = arith.mulf %36, %40 : vector<8x128xf32>
    %42 = arith.index_cast %c0_i32 : i32 to index
    %c0_18 = arith.constant 0 : index
    %c0_19 = arith.constant 0 : index
    %43 = vector.load %arg11[%42, %c0_18, %c0_19] : memref<8x8x128xf32, #tpu.memory_space<vmem>>, vector<1x8x128xf32>
    %44 = vector.shape_cast %43 : vector<1x8x128xf32> to vector<8x128xf32>
    %45 = vector.shape_cast %41 : vector<8x128xf32> to vector<1x8x128xf32>
    tpu.vector_store %arg11[%42, %c0_18, %c0_19], %45 {strides = array<i32>} : memref<8x8x128xf32, #tpu.memory_space<vmem>>, vector<1x8x128xf32>,
    %c1_i32 = arith.constant 1 : i32
    %46 = arith.index_cast %c1_i32 : i32 to index
    %c0_20 = arith.constant 0 : index
    %c0_21 = arith.constant 0 : index
    %47 = vector.load %arg10[%46, %c0_20, %c0_21] : memref<8x8x512xf32, #tpu.memory_space<vmem>>, vector<1x8x512xf32>
    %48 = vector.shape_cast %47 : vector<1x8x512xf32> to vector<8x512xf32>
    %49 = arith.truncf %41 : vector<8x128xf32> to vector<8x128xbf16>
    %cst_22 = arith.constant dense<0.000000e+00> : vector<8x512xf32>
    %50 = tpu.matmul %49, %10, %cst_22 {dimension_numbers = #tpu.dot_dimension_numbers<[1], [0], [0], [1], [0, 0, 1, 1], [], []>} : vector<8x128xbf16>, vector<128x512xbf16>, vector<8x512xf32> -> vector<8x512xf32>
    %51 = arith.addf %48, %50 : vector<8x512xf32>
    %52 = vector.extract_strided_slice %51 {offsets = [0, 0], sizes = [8, 128], strides = [1, 1]} : vector<8x512xf32> to vector<8x128xf32>
    %53 = arith.negf %52 : vector<8x128xf32>
    %54 = math.exp %53 : vector<8x128xf32>
    %cst_23 = arith.constant 1.000000e+00 : f32
    %55 = vector.broadcast %cst_23 : f32 to vector<8x128xf32>
    %56 = arith.addf %55, %54 : vector<8x128xf32>
    %57 = arith.divf %55, %56 : vector<8x128xf32>
    %58 = vector.extract_strided_slice %51 {offsets = [0, 128], sizes = [8, 128], strides = [1, 1]} : vector<8x512xf32> to vector<8x128xf32>
    %59 = arith.negf %58 : vector<8x128xf32>
    %60 = math.exp %59 : vector<8x128xf32>
    %cst_24 = arith.constant 1.000000e+00 : f32
    %61 = vector.broadcast %cst_24 : f32 to vector<8x128xf32>
    %62 = arith.addf %61, %60 : vector<8x128xf32>
    %63 = arith.divf %61, %62 : vector<8x128xf32>
    %64 = vector.extract_strided_slice %51 {offsets = [0, 256], sizes = [8, 128], strides = [1, 1]} : vector<8x512xf32> to vector<8x128xf32>
    %65 = math.tanh %64 : vector<8x128xf32>
    %66 = vector.extract_strided_slice %51 {offsets = [0, 384], sizes = [8, 128], strides = [1, 1]} : vector<8x512xf32> to vector<8x128xf32>
    %67 = arith.negf %66 : vector<8x128xf32>
    %68 = math.exp %67 : vector<8x128xf32>
    %cst_25 = arith.constant 1.000000e+00 : f32
    %69 = vector.broadcast %cst_25 : f32 to vector<8x128xf32>
    %70 = arith.addf %69, %68 : vector<8x128xf32>
    %71 = arith.divf %69, %70 : vector<8x128xf32>
    %72 = arith.mulf %63, %39 : vector<8x128xf32>
    %73 = arith.mulf %57, %65 : vector<8x128xf32>
    %74 = arith.addf %72, %73 : vector<8x128xf32>
    %75 = math.tanh %74 : vector<8x128xf32>
    %76 = arith.mulf %71, %75 : vector<8x128xf32>
    %77 = arith.index_cast %c1_i32 : i32 to index
    %c0_26 = arith.constant 0 : index
    %c0_27 = arith.constant 0 : index
    %78 = vector.load %arg11[%77, %c0_26, %c0_27] : memref<8x8x128xf32, #tpu.memory_space<vmem>>, vector<1x8x128xf32>
    %79 = vector.shape_cast %78 : vector<1x8x128xf32> to vector<8x128xf32>
    %80 = vector.shape_cast %76 : vector<8x128xf32> to vector<1x8x128xf32>
    tpu.vector_store %arg11[%77, %c0_26, %c0_27], %80 {strides = array<i32>} : memref<8x8x128xf32, #tpu.memory_space<vmem>>, vector<1x8x128xf32>,
    %c2_i32 = arith.constant 2 : i32
    %81 = arith.index_cast %c2_i32 : i32 to index
    %c0_28 = arith.constant 0 : index
    %c0_29 = arith.constant 0 : index
    %82 = vector.load %arg10[%81, %c0_28, %c0_29] : memref<8x8x512xf32, #tpu.memory_space<vmem>>, vector<1x8x512xf32>
    %83 = vector.shape_cast %82 : vector<1x8x512xf32> to vector<8x512xf32>
    %84 = arith.truncf %76 : vector<8x128xf32> to vector<8x128xbf16>
    %cst_30 = arith.constant dense<0.000000e+00> : vector<8x512xf32>
    %85 = tpu.matmul %84, %10, %cst_30 {dimension_numbers = #tpu.dot_dimension_numbers<[1], [0], [0], [1], [0, 0, 1, 1], [], []>} : vector<8x128xbf16>, vector<128x512xbf16>, vector<8x512xf32> -> vector<8x512xf32>
    %86 = arith.addf %83, %85 : vector<8x512xf32>
    %87 = vector.extract_strided_slice %86 {offsets = [0, 0], sizes = [8, 128], strides = [1, 1]} : vector<8x512xf32> to vector<8x128xf32>
    %88 = arith.negf %87 : vector<8x128xf32>
    %89 = math.exp %88 : vector<8x128xf32>
    %cst_31 = arith.constant 1.000000e+00 : f32
    %90 = vector.broadcast %cst_31 : f32 to vector<8x128xf32>
    %91 = arith.addf %90, %89 : vector<8x128xf32>
    %92 = arith.divf %90, %91 : vector<8x128xf32>
    %93 = vector.extract_strided_slice %86 {offsets = [0, 128], sizes = [8, 128], strides = [1, 1]} : vector<8x512xf32> to vector<8x128xf32>
    %94 = arith.negf %93 : vector<8x128xf32>
    %95 = math.exp %94 : vector<8x128xf32>
    %cst_32 = arith.constant 1.000000e+00 : f32
    %96 = vector.broadcast %cst_32 : f32 to vector<8x128xf32>
    %97 = arith.addf %96, %95 : vector<8x128xf32>
    %98 = arith.divf %96, %97 : vector<8x128xf32>
    %99 = vector.extract_strided_slice %86 {offsets = [0, 256], sizes = [8, 128], strides = [1, 1]} : vector<8x512xf32> to vector<8x128xf32>
    %100 = math.tanh %99 : vector<8x128xf32>
    %101 = vector.extract_strided_slice %86 {offsets = [0, 384], sizes = [8, 128], strides = [1, 1]} : vector<8x512xf32> to vector<8x128xf32>
    %102 = arith.negf %101 : vector<8x128xf32>
    %103 = math.exp %102 : vector<8x128xf32>
    %cst_33 = arith.constant 1.000000e+00 : f32
    %104 = vector.broadcast %cst_33 : f32 to vector<8x128xf32>
    %105 = arith.addf %104, %103 : vector<8x128xf32>
    %106 = arith.divf %104, %105 : vector<8x128xf32>
    %107 = arith.mulf %98, %74 : vector<8x128xf32>
    %108 = arith.mulf %92, %100 : vector<8x128xf32>
    %109 = arith.addf %107, %108 : vector<8x128xf32>
    %110 = math.tanh %109 : vector<8x128xf32>
    %111 = arith.mulf %106, %110 : vector<8x128xf32>
    %112 = arith.index_cast %c2_i32 : i32 to index
    %c0_34 = arith.constant 0 : index
    %c0_35 = arith.constant 0 : index
    %113 = vector.load %arg11[%112, %c0_34, %c0_35] : memref<8x8x128xf32, #tpu.memory_space<vmem>>, vector<1x8x128xf32>
    %114 = vector.shape_cast %113 : vector<1x8x128xf32> to vector<8x128xf32>
    %115 = vector.shape_cast %111 : vector<8x128xf32> to vector<1x8x128xf32>
    tpu.vector_store %arg11[%112, %c0_34, %c0_35], %115 {strides = array<i32>} : memref<8x8x128xf32, #tpu.memory_space<vmem>>, vector<1x8x128xf32>,
    %c3_i32 = arith.constant 3 : i32
    %116 = arith.index_cast %c3_i32 : i32 to index
    %c0_36 = arith.constant 0 : index
    %c0_37 = arith.constant 0 : index
    %117 = vector.load %arg10[%116, %c0_36, %c0_37] : memref<8x8x512xf32, #tpu.memory_space<vmem>>, vector<1x8x512xf32>
    %118 = vector.shape_cast %117 : vector<1x8x512xf32> to vector<8x512xf32>
    %119 = arith.truncf %111 : vector<8x128xf32> to vector<8x128xbf16>
    %cst_38 = arith.constant dense<0.000000e+00> : vector<8x512xf32>
    %120 = tpu.matmul %119, %10, %cst_38 {dimension_numbers = #tpu.dot_dimension_numbers<[1], [0], [0], [1], [0, 0, 1, 1], [], []>} : vector<8x128xbf16>, vector<128x512xbf16>, vector<8x512xf32> -> vector<8x512xf32>
    %121 = arith.addf %118, %120 : vector<8x512xf32>
    %122 = vector.extract_strided_slice %121 {offsets = [0, 0], sizes = [8, 128], strides = [1, 1]} : vector<8x512xf32> to vector<8x128xf32>
    %123 = arith.negf %122 : vector<8x128xf32>
    %124 = math.exp %123 : vector<8x128xf32>
    %cst_39 = arith.constant 1.000000e+00 : f32
    %125 = vector.broadcast %cst_39 : f32 to vector<8x128xf32>
    %126 = arith.addf %125, %124 : vector<8x128xf32>
    %127 = arith.divf %125, %126 : vector<8x128xf32>
    %128 = vector.extract_strided_slice %121 {offsets = [0, 128], sizes = [8, 128], strides = [1, 1]} : vector<8x512xf32> to vector<8x128xf32>
    %129 = arith.negf %128 : vector<8x128xf32>
    %130 = math.exp %129 : vector<8x128xf32>
    %cst_40 = arith.constant 1.000000e+00 : f32
    %131 = vector.broadcast %cst_40 : f32 to vector<8x128xf32>
    %132 = arith.addf %131, %130 : vector<8x128xf32>
    %133 = arith.divf %131, %132 : vector<8x128xf32>
    %134 = vector.extract_strided_slice %121 {offsets = [0, 256], sizes = [8, 128], strides = [1, 1]} : vector<8x512xf32> to vector<8x128xf32>
    %135 = math.tanh %134 : vector<8x128xf32>
    %136 = vector.extract_strided_slice %121 {offsets = [0, 384], sizes = [8, 128], strides = [1, 1]} : vector<8x512xf32> to vector<8x128xf32>
    %137 = arith.negf %136 : vector<8x128xf32>
    %138 = math.exp %137 : vector<8x128xf32>
    %cst_41 = arith.constant 1.000000e+00 : f32
    %139 = vector.broadcast %cst_41 : f32 to vector<8x128xf32>
    %140 = arith.addf %139, %138 : vector<8x128xf32>
    %141 = arith.divf %139, %140 : vector<8x128xf32>
    %142 = arith.mulf %133, %109 : vector<8x128xf32>
    %143 = arith.mulf %127, %135 : vector<8x128xf32>
    %144 = arith.addf %142, %143 : vector<8x128xf32>
    %145 = math.tanh %144 : vector<8x128xf32>
    %146 = arith.mulf %141, %145 : vector<8x128xf32>
    %147 = arith.index_cast %c3_i32 : i32 to index
    %c0_42 = arith.constant 0 : index
    %c0_43 = arith.constant 0 : index
    %148 = vector.load %arg11[%147, %c0_42, %c0_43] : memref<8x8x128xf32, #tpu.memory_space<vmem>>, vector<1x8x128xf32>
    %149 = vector.shape_cast %148 : vector<1x8x128xf32> to vector<8x128xf32>
    %150 = vector.shape_cast %146 : vector<8x128xf32> to vector<1x8x128xf32>
    tpu.vector_store %arg11[%147, %c0_42, %c0_43], %150 {strides = array<i32>} : memref<8x8x128xf32, #tpu.memory_space<vmem>>, vector<1x8x128xf32>,
    %c4_i32 = arith.constant 4 : i32
    %151 = arith.index_cast %c4_i32 : i32 to index
    %c0_44 = arith.constant 0 : index
    %c0_45 = arith.constant 0 : index
    %152 = vector.load %arg10[%151, %c0_44, %c0_45] : memref<8x8x512xf32, #tpu.memory_space<vmem>>, vector<1x8x512xf32>
    %153 = vector.shape_cast %152 : vector<1x8x512xf32> to vector<8x512xf32>
    %154 = arith.truncf %146 : vector<8x128xf32> to vector<8x128xbf16>
    %cst_46 = arith.constant dense<0.000000e+00> : vector<8x512xf32>
    %155 = tpu.matmul %154, %10, %cst_46 {dimension_numbers = #tpu.dot_dimension_numbers<[1], [0], [0], [1], [0, 0, 1, 1], [], []>} : vector<8x128xbf16>, vector<128x512xbf16>, vector<8x512xf32> -> vector<8x512xf32>
    %156 = arith.addf %153, %155 : vector<8x512xf32>
    %157 = vector.extract_strided_slice %156 {offsets = [0, 0], sizes = [8, 128], strides = [1, 1]} : vector<8x512xf32> to vector<8x128xf32>
    %158 = arith.negf %157 : vector<8x128xf32>
    %159 = math.exp %158 : vector<8x128xf32>
    %cst_47 = arith.constant 1.000000e+00 : f32
    %160 = vector.broadcast %cst_47 : f32 to vector<8x128xf32>
    %161 = arith.addf %160, %159 : vector<8x128xf32>
    %162 = arith.divf %160, %161 : vector<8x128xf32>
    %163 = vector.extract_strided_slice %156 {offsets = [0, 128], sizes = [8, 128], strides = [1, 1]} : vector<8x512xf32> to vector<8x128xf32>
    %164 = arith.negf %163 : vector<8x128xf32>
    %165 = math.exp %164 : vector<8x128xf32>
    %cst_48 = arith.constant 1.000000e+00 : f32
    %166 = vector.broadcast %cst_48 : f32 to vector<8x128xf32>
    %167 = arith.addf %166, %165 : vector<8x128xf32>
    %168 = arith.divf %166, %167 : vector<8x128xf32>
    %169 = vector.extract_strided_slice %156 {offsets = [0, 256], sizes = [8, 128], strides = [1, 1]} : vector<8x512xf32> to vector<8x128xf32>
    %170 = math.tanh %169 : vector<8x128xf32>
    %171 = vector.extract_strided_slice %156 {offsets = [0, 384], sizes = [8, 128], strides = [1, 1]} : vector<8x512xf32> to vector<8x128xf32>
    %172 = arith.negf %171 : vector<8x128xf32>
    %173 = math.exp %172 : vector<8x128xf32>
    %cst_49 = arith.constant 1.000000e+00 : f32
    %174 = vector.broadcast %cst_49 : f32 to vector<8x128xf32>
    %175 = arith.addf %174, %173 : vector<8x128xf32>
    %176 = arith.divf %174, %175 : vector<8x128xf32>
    %177 = arith.mulf %168, %144 : vector<8x128xf32>
    %178 = arith.mulf %162, %170 : vector<8x128xf32>
    %179 = arith.addf %177, %178 : vector<8x128xf32>
    %180 = math.tanh %179 : vector<8x128xf32>
    %181 = arith.mulf %176, %180 : vector<8x128xf32>
    %182 = arith.index_cast %c4_i32 : i32 to index
    %c0_50 = arith.constant 0 : index
    %c0_51 = arith.constant 0 : index
    %183 = vector.load %arg11[%182, %c0_50, %c0_51] : memref<8x8x128xf32, #tpu.memory_space<vmem>>, vector<1x8x128xf32>
    %184 = vector.shape_cast %183 : vector<1x8x128xf32> to vector<8x128xf32>
    %185 = vector.shape_cast %181 : vector<8x128xf32> to vector<1x8x128xf32>
    tpu.vector_store %arg11[%182, %c0_50, %c0_51], %185 {strides = array<i32>} : memref<8x8x128xf32, #tpu.memory_space<vmem>>, vector<1x8x128xf32>,
    %c5_i32 = arith.constant 5 : i32
    %186 = arith.index_cast %c5_i32 : i32 to index
    %c0_52 = arith.constant 0 : index
    %c0_53 = arith.constant 0 : index
    %187 = vector.load %arg10[%186, %c0_52, %c0_53] : memref<8x8x512xf32, #tpu.memory_space<vmem>>, vector<1x8x512xf32>
    %188 = vector.shape_cast %187 : vector<1x8x512xf32> to vector<8x512xf32>
    %189 = arith.truncf %181 : vector<8x128xf32> to vector<8x128xbf16>
    %cst_54 = arith.constant dense<0.000000e+00> : vector<8x512xf32>
    %190 = tpu.matmul %189, %10, %cst_54 {dimension_numbers = #tpu.dot_dimension_numbers<[1], [0], [0], [1], [0, 0, 1, 1], [], []>} : vector<8x128xbf16>, vector<128x512xbf16>, vector<8x512xf32> -> vector<8x512xf32>
    %191 = arith.addf %188, %190 : vector<8x512xf32>
    %192 = vector.extract_strided_slice %191 {offsets = [0, 0], sizes = [8, 128], strides = [1, 1]} : vector<8x512xf32> to vector<8x128xf32>
    %193 = arith.negf %192 : vector<8x128xf32>
    %194 = math.exp %193 : vector<8x128xf32>
    %cst_55 = arith.constant 1.000000e+00 : f32
    %195 = vector.broadcast %cst_55 : f32 to vector<8x128xf32>
    %196 = arith.addf %195, %194 : vector<8x128xf32>
    %197 = arith.divf %195, %196 : vector<8x128xf32>
    %198 = vector.extract_strided_slice %191 {offsets = [0, 128], sizes = [8, 128], strides = [1, 1]} : vector<8x512xf32> to vector<8x128xf32>
    %199 = arith.negf %198 : vector<8x128xf32>
    %200 = math.exp %199 : vector<8x128xf32>
    %cst_56 = arith.constant 1.000000e+00 : f32
    %201 = vector.broadcast %cst_56 : f32 to vector<8x128xf32>
    %202 = arith.addf %201, %200 : vector<8x128xf32>
    %203 = arith.divf %201, %202 : vector<8x128xf32>
    %204 = vector.extract_strided_slice %191 {offsets = [0, 256], sizes = [8, 128], strides = [1, 1]} : vector<8x512xf32> to vector<8x128xf32>
    %205 = math.tanh %204 : vector<8x128xf32>
    %206 = vector.extract_strided_slice %191 {offsets = [0, 384], sizes = [8, 128], strides = [1, 1]} : vector<8x512xf32> to vector<8x128xf32>
    %207 = arith.negf %206 : vector<8x128xf32>
    %208 = math.exp %207 : vector<8x128xf32>
    %cst_57 = arith.constant 1.000000e+00 : f32
    %209 = vector.broadcast %cst_57 : f32 to vector<8x128xf32>
    %210 = arith.addf %209, %208 : vector<8x128xf32>
    %211 = arith.divf %209, %210 : vector<8x128xf32>
    %212 = arith.mulf %203, %179 : vector<8x128xf32>
    %213 = arith.mulf %197, %205 : vector<8x128xf32>
    %214 = arith.addf %212, %213 : vector<8x128xf32>
    %215 = math.tanh %214 : vector<8x128xf32>
    %216 = arith.mulf %211, %215 : vector<8x128xf32>
    %217 = arith.index_cast %c5_i32 : i32 to index
    %c0_58 = arith.constant 0 : index
    %c0_59 = arith.constant 0 : index
    %218 = vector.load %arg11[%217, %c0_58, %c0_59] : memref<8x8x128xf32, #tpu.memory_space<vmem>>, vector<1x8x128xf32>
    %219 = vector.shape_cast %218 : vector<1x8x128xf32> to vector<8x128xf32>
    %220 = vector.shape_cast %216 : vector<8x128xf32> to vector<1x8x128xf32>
    tpu.vector_store %arg11[%217, %c0_58, %c0_59], %220 {strides = array<i32>} : memref<8x8x128xf32, #tpu.memory_space<vmem>>, vector<1x8x128xf32>,
    %c6_i32 = arith.constant 6 : i32
    %221 = arith.index_cast %c6_i32 : i32 to index
    %c0_60 = arith.constant 0 : index
    %c0_61 = arith.constant 0 : index
    %222 = vector.load %arg10[%221, %c0_60, %c0_61] : memref<8x8x512xf32, #tpu.memory_space<vmem>>, vector<1x8x512xf32>
    %223 = vector.shape_cast %222 : vector<1x8x512xf32> to vector<8x512xf32>
    %224 = arith.truncf %216 : vector<8x128xf32> to vector<8x128xbf16>
    %cst_62 = arith.constant dense<0.000000e+00> : vector<8x512xf32>
    %225 = tpu.matmul %224, %10, %cst_62 {dimension_numbers = #tpu.dot_dimension_numbers<[1], [0], [0], [1], [0, 0, 1, 1], [], []>} : vector<8x128xbf16>, vector<128x512xbf16>, vector<8x512xf32> -> vector<8x512xf32>
    %226 = arith.addf %223, %225 : vector<8x512xf32>
    %227 = vector.extract_strided_slice %226 {offsets = [0, 0], sizes = [8, 128], strides = [1, 1]} : vector<8x512xf32> to vector<8x128xf32>
    %228 = arith.negf %227 : vector<8x128xf32>
    %229 = math.exp %228 : vector<8x128xf32>
    %cst_63 = arith.constant 1.000000e+00 : f32
    %230 = vector.broadcast %cst_63 : f32 to vector<8x128xf32>
    %231 = arith.addf %230, %229 : vector<8x128xf32>
    %232 = arith.divf %230, %231 : vector<8x128xf32>
    %233 = vector.extract_strided_slice %226 {offsets = [0, 128], sizes = [8, 128], strides = [1, 1]} : vector<8x512xf32> to vector<8x128xf32>
    %234 = arith.negf %233 : vector<8x128xf32>
    %235 = math.exp %234 : vector<8x128xf32>
    %cst_64 = arith.constant 1.000000e+00 : f32
    %236 = vector.broadcast %cst_64 : f32 to vector<8x128xf32>
    %237 = arith.addf %236, %235 : vector<8x128xf32>
    %238 = arith.divf %236, %237 : vector<8x128xf32>
    %239 = vector.extract_strided_slice %226 {offsets = [0, 256], sizes = [8, 128], strides = [1, 1]} : vector<8x512xf32> to vector<8x128xf32>
    %240 = math.tanh %239 : vector<8x128xf32>
    %241 = vector.extract_strided_slice %226 {offsets = [0, 384], sizes = [8, 128], strides = [1, 1]} : vector<8x512xf32> to vector<8x128xf32>
    %242 = arith.negf %241 : vector<8x128xf32>
    %243 = math.exp %242 : vector<8x128xf32>
    %cst_65 = arith.constant 1.000000e+00 : f32
    %244 = vector.broadcast %cst_65 : f32 to vector<8x128xf32>
    %245 = arith.addf %244, %243 : vector<8x128xf32>
    %246 = arith.divf %244, %245 : vector<8x128xf32>
    %247 = arith.mulf %238, %214 : vector<8x128xf32>
    %248 = arith.mulf %232, %240 : vector<8x128xf32>
    %249 = arith.addf %247, %248 : vector<8x128xf32>
    %250 = math.tanh %249 : vector<8x128xf32>
    %251 = arith.mulf %246, %250 : vector<8x128xf32>
    %252 = arith.index_cast %c6_i32 : i32 to index
    %c0_66 = arith.constant 0 : index
    %c0_67 = arith.constant 0 : index
    %253 = vector.load %arg11[%252, %c0_66, %c0_67] : memref<8x8x128xf32, #tpu.memory_space<vmem>>, vector<1x8x128xf32>
    %254 = vector.shape_cast %253 : vector<1x8x128xf32> to vector<8x128xf32>
    %255 = vector.shape_cast %251 : vector<8x128xf32> to vector<1x8x128xf32>
    tpu.vector_store %arg11[%252, %c0_66, %c0_67], %255 {strides = array<i32>} : memref<8x8x128xf32, #tpu.memory_space<vmem>>, vector<1x8x128xf32>,
    %c7_i32 = arith.constant 7 : i32
    %256 = arith.index_cast %c7_i32 : i32 to index
    %c0_68 = arith.constant 0 : index
    %c0_69 = arith.constant 0 : index
    %257 = vector.load %arg10[%256, %c0_68, %c0_69] : memref<8x8x512xf32, #tpu.memory_space<vmem>>, vector<1x8x512xf32>
    %258 = vector.shape_cast %257 : vector<1x8x512xf32> to vector<8x512xf32>
    %259 = arith.truncf %251 : vector<8x128xf32> to vector<8x128xbf16>
    %cst_70 = arith.constant dense<0.000000e+00> : vector<8x512xf32>
    %260 = tpu.matmul %259, %10, %cst_70 {dimension_numbers = #tpu.dot_dimension_numbers<[1], [0], [0], [1], [0, 0, 1, 1], [], []>} : vector<8x128xbf16>, vector<128x512xbf16>, vector<8x512xf32> -> vector<8x512xf32>
    %261 = arith.addf %258, %260 : vector<8x512xf32>
    %262 = vector.extract_strided_slice %261 {offsets = [0, 0], sizes = [8, 128], strides = [1, 1]} : vector<8x512xf32> to vector<8x128xf32>
    %263 = arith.negf %262 : vector<8x128xf32>
    %264 = math.exp %263 : vector<8x128xf32>
    %cst_71 = arith.constant 1.000000e+00 : f32
    %265 = vector.broadcast %cst_71 : f32 to vector<8x128xf32>
    %266 = arith.addf %265, %264 : vector<8x128xf32>
    %267 = arith.divf %265, %266 : vector<8x128xf32>
    %268 = vector.extract_strided_slice %261 {offsets = [0, 128], sizes = [8, 128], strides = [1, 1]} : vector<8x512xf32> to vector<8x128xf32>
    %269 = arith.negf %268 : vector<8x128xf32>
    %270 = math.exp %269 : vector<8x128xf32>
    %cst_72 = arith.constant 1.000000e+00 : f32
    %271 = vector.broadcast %cst_72 : f32 to vector<8x128xf32>
    %272 = arith.addf %271, %270 : vector<8x128xf32>
    %273 = arith.divf %271, %272 : vector<8x128xf32>
    %274 = vector.extract_strided_slice %261 {offsets = [0, 256], sizes = [8, 128], strides = [1, 1]} : vector<8x512xf32> to vector<8x128xf32>
    %275 = math.tanh %274 : vector<8x128xf32>
    %276 = vector.extract_strided_slice %261 {offsets = [0, 384], sizes = [8, 128], strides = [1, 1]} : vector<8x512xf32> to vector<8x128xf32>
    %277 = arith.negf %276 : vector<8x128xf32>
    %278 = math.exp %277 : vector<8x128xf32>
    %cst_73 = arith.constant 1.000000e+00 : f32
    %279 = vector.broadcast %cst_73 : f32 to vector<8x128xf32>
    %280 = arith.addf %279, %278 : vector<8x128xf32>
    %281 = arith.divf %279, %280 : vector<8x128xf32>
    %282 = arith.mulf %273, %249 : vector<8x128xf32>
    %283 = arith.mulf %267, %275 : vector<8x128xf32>
    %284 = arith.addf %282, %283 : vector<8x128xf32>
    %285 = math.tanh %284 : vector<8x128xf32>
    %286 = arith.mulf %281, %285 : vector<8x128xf32>
    %287 = arith.index_cast %c7_i32 : i32 to index
    %c0_74 = arith.constant 0 : index
    %c0_75 = arith.constant 0 : index
    %288 = vector.load %arg11[%287, %c0_74, %c0_75] : memref<8x8x128xf32, #tpu.memory_space<vmem>>, vector<1x8x128xf32>
    %289 = vector.shape_cast %288 : vector<1x8x128xf32> to vector<8x128xf32>
    %290 = vector.shape_cast %286 : vector<8x128xf32> to vector<1x8x128xf32>
    tpu.vector_store %arg11[%287, %c0_74, %c0_75], %290 {strides = array<i32>} : memref<8x8x128xf32, #tpu.memory_space<vmem>>, vector<1x8x128xf32>,
    %c8_i32 = arith.constant 8 : i32
    %c0_76 = arith.constant 0 : index
    %c0_77 = arith.constant 0 : index
    %c0_78 = arith.constant 0 : index
    %291 = vector.load %arg11[%c0_76, %c0_77, %c0_78] : memref<8x8x128xf32, #tpu.memory_space<vmem>>, vector<8x8x128xf32>
    %292 = vector.shape_cast %291 : vector<8x8x128xf32> to vector<64x128xf32>
    %293 = arith.truncf %292 : vector<64x128xf32> to vector<64x128xbf16>
    %c0_79 = arith.constant 0 : index
    %c0_80 = arith.constant 0 : index
    %294 = vector.load %arg4[%c0_79, %c0_80] : memref<128x128xbf16, #tpu.memory_space<vmem>>, vector<128x128xbf16>
    %cst_81 = arith.constant dense<0.000000e+00> : vector<64x128xf32>
    %295 = tpu.matmul %293, %294, %cst_81 {dimension_numbers = #tpu.dot_dimension_numbers<[1], [0], [0], [1], [0, 0, 1, 1], [], []>} : vector<64x128xbf16>, vector<128x128xbf16>, vector<64x128xf32> -> vector<64x128xf32>
    %c0_82 = arith.constant 0 : index
    %c0_83 = arith.constant 0 : index
    %296 = vector.load %arg6[%c0_82, %c0_83] : memref<1x128xf32, #tpu.memory_space<vmem>>, vector<1x128xf32>
    %297 = vector.broadcast %296 : vector<1x128xf32> to vector<64x128xf32>
    %298 = arith.addf %295, %297 : vector<64x128xf32>
    %299 = vector.shape_cast %298 : vector<64x128xf32> to vector<8x8x128xf32>
    %c0_84 = arith.constant 0 : index
    %c0_85 = arith.constant 0 : index
    %c0_86 = arith.constant 0 : index
    %300 = vector.load %arg12[%c0_84, %c0_85, %c0_86] : memref<8x8x128xf32, #tpu.memory_space<vmem>>, vector<8x8x128xf32>
    tpu.vector_store %arg12[%c0_84, %c0_85, %c0_86], %299 {strides = array<i32>} : memref<8x8x128xf32, #tpu.memory_space<vmem>>, vector<8x8x128xf32>,
    %c0_87 = arith.constant 0 : index
    %c0_88 = arith.constant 0 : index
    %301 = vector.load %arg5[%c0_87, %c0_88] : memref<128x128xbf16, #tpu.memory_space<vmem>>, vector<128x128xbf16>
    %c0_i32_89 = arith.constant 0 : i32
    %302 = arith.index_cast %c0_i32_89 : i32 to index
    %c0_90 = arith.constant 0 : index
    %c0_91 = arith.constant 0 : index
    %303 = vector.load %arg12[%302, %c0_90, %c0_91] : memref<8x8x128xf32, #tpu.memory_space<vmem>>, vector<1x8x128xf32>
    %304 = vector.shape_cast %303 : vector<1x8x128xf32> to vector<8x128xf32>
    %305 = arith.truncf %9 : vector<8x128xf32> to vector<8x128xbf16>
    %cst_92 = arith.constant dense<0.000000e+00> : vector<8x128xf32>
    %306 = tpu.matmul %305, %301, %cst_92 {dimension_numbers = #tpu.dot_dimension_numbers<[1], [0], [0], [1], [0, 0, 1, 1], [], []>} : vector<8x128xbf16>, vector<128x128xbf16>, vector<8x128xf32> -> vector<8x128xf32>
    %307 = arith.addf %304, %306 : vector<8x128xf32>
    %308 = math.tanh %307 : vector<8x128xf32>
    %c1_i32_93 = arith.constant 1 : i32
    %309 = arith.index_cast %c1_i32_93 : i32 to index
    %c0_94 = arith.constant 0 : index
    %c0_95 = arith.constant 0 : index
    %310 = vector.load %arg12[%309, %c0_94, %c0_95] : memref<8x8x128xf32, #tpu.memory_space<vmem>>, vector<1x8x128xf32>
    %311 = vector.shape_cast %310 : vector<1x8x128xf32> to vector<8x128xf32>
    %312 = arith.truncf %308 : vector<8x128xf32> to vector<8x128xbf16>
    %cst_96 = arith.constant dense<0.000000e+00> : vector<8x128xf32>
    %313 = tpu.matmul %312, %301, %cst_96 {dimension_numbers = #tpu.dot_dimension_numbers<[1], [0], [0], [1], [0, 0, 1, 1], [], []>} : vector<8x128xbf16>, vector<128x128xbf16>, vector<8x128xf32> -> vector<8x128xf32>
    %314 = arith.addf %311, %313 : vector<8x128xf32>
    %315 = math.tanh %314 : vector<8x128xf32>
    %c2_i32_97 = arith.constant 2 : i32
    %316 = arith.index_cast %c2_i32_97 : i32 to index
    %c0_98 = arith.constant 0 : index
    %c0_99 = arith.constant 0 : index
    %317 = vector.load %arg12[%316, %c0_98, %c0_99] : memref<8x8x128xf32, #tpu.memory_space<vmem>>, vector<1x8x128xf32>
    %318 = vector.shape_cast %317 : vector<1x8x128xf32> to vector<8x128xf32>
    %319 = arith.truncf %315 : vector<8x128xf32> to vector<8x128xbf16>
    %cst_100 = arith.constant dense<0.000000e+00> : vector<8x128xf32>
    %320 = tpu.matmul %319, %301, %cst_100 {dimension_numbers = #tpu.dot_dimension_numbers<[1], [0], [0], [1], [0, 0, 1, 1], [], []>} : vector<8x128xbf16>, vector<128x128xbf16>, vector<8x128xf32> -> vector<8x128xf32>
    %321 = arith.addf %318, %320 : vector<8x128xf32>
    %322 = math.tanh %321 : vector<8x128xf32>
    %c3_i32_101 = arith.constant 3 : i32
    %323 = arith.index_cast %c3_i32_101 : i32 to index
    %c0_102 = arith.constant 0 : index
    %c0_103 = arith.constant 0 : index
    %324 = vector.load %arg12[%323, %c0_102, %c0_103] : memref<8x8x128xf32, #tpu.memory_space<vmem>>, vector<1x8x128xf32>
    %325 = vector.shape_cast %324 : vector<1x8x128xf32> to vector<8x128xf32>
    %326 = arith.truncf %322 : vector<8x128xf32> to vector<8x128xbf16>
    %cst_104 = arith.constant dense<0.000000e+00> : vector<8x128xf32>
    %327 = tpu.matmul %326, %301, %cst_104 {dimension_numbers = #tpu.dot_dimension_numbers<[1], [0], [0], [1], [0, 0, 1, 1], [], []>} : vector<8x128xbf16>, vector<128x128xbf16>, vector<8x128xf32> -> vector<8x128xf32>
    %328 = arith.addf %325, %327 : vector<8x128xf32>
    %329 = math.tanh %328 : vector<8x128xf32>
    %c4_i32_105 = arith.constant 4 : i32
    %330 = arith.index_cast %c4_i32_105 : i32 to index
    %c0_106 = arith.constant 0 : index
    %c0_107 = arith.constant 0 : index
    %331 = vector.load %arg12[%330, %c0_106, %c0_107] : memref<8x8x128xf32, #tpu.memory_space<vmem>>, vector<1x8x128xf32>
    %332 = vector.shape_cast %331 : vector<1x8x128xf32> to vector<8x128xf32>
    %333 = arith.truncf %329 : vector<8x128xf32> to vector<8x128xbf16>
    %cst_108 = arith.constant dense<0.000000e+00> : vector<8x128xf32>
    %334 = tpu.matmul %333, %301, %cst_108 {dimension_numbers = #tpu.dot_dimension_numbers<[1], [0], [0], [1], [0, 0, 1, 1], [], []>} : vector<8x128xbf16>, vector<128x128xbf16>, vector<8x128xf32> -> vector<8x128xf32>
    %335 = arith.addf %332, %334 : vector<8x128xf32>
    %336 = math.tanh %335 : vector<8x128xf32>
    %c5_i32_109 = arith.constant 5 : i32
    %337 = arith.index_cast %c5_i32_109 : i32 to index
    %c0_110 = arith.constant 0 : index
    %c0_111 = arith.constant 0 : index
    %338 = vector.load %arg12[%337, %c0_110, %c0_111] : memref<8x8x128xf32, #tpu.memory_space<vmem>>, vector<1x8x128xf32>
    %339 = vector.shape_cast %338 : vector<1x8x128xf32> to vector<8x128xf32>
    %340 = arith.truncf %336 : vector<8x128xf32> to vector<8x128xbf16>
    %cst_112 = arith.constant dense<0.000000e+00> : vector<8x128xf32>
    %341 = tpu.matmul %340, %301, %cst_112 {dimension_numbers = #tpu.dot_dimension_numbers<[1], [0], [0], [1], [0, 0, 1, 1], [], []>} : vector<8x128xbf16>, vector<128x128xbf16>, vector<8x128xf32> -> vector<8x128xf32>
    %342 = arith.addf %339, %341 : vector<8x128xf32>
    %343 = math.tanh %342 : vector<8x128xf32>
    %c6_i32_113 = arith.constant 6 : i32
    %344 = arith.index_cast %c6_i32_113 : i32 to index
    %c0_114 = arith.constant 0 : index
    %c0_115 = arith.constant 0 : index
    %345 = vector.load %arg12[%344, %c0_114, %c0_115] : memref<8x8x128xf32, #tpu.memory_space<vmem>>, vector<1x8x128xf32>
    %346 = vector.shape_cast %345 : vector<1x8x128xf32> to vector<8x128xf32>
    %347 = arith.truncf %343 : vector<8x128xf32> to vector<8x128xbf16>
    %cst_116 = arith.constant dense<0.000000e+00> : vector<8x128xf32>
    %348 = tpu.matmul %347, %301, %cst_116 {dimension_numbers = #tpu.dot_dimension_numbers<[1], [0], [0], [1], [0, 0, 1, 1], [], []>} : vector<8x128xbf16>, vector<128x128xbf16>, vector<8x128xf32> -> vector<8x128xf32>
    %349 = arith.addf %346, %348 : vector<8x128xf32>
    %350 = math.tanh %349 : vector<8x128xf32>
    %c7_i32_117 = arith.constant 7 : i32
    %351 = arith.index_cast %c7_i32_117 : i32 to index
    %c0_118 = arith.constant 0 : index
    %c0_119 = arith.constant 0 : index
    %352 = vector.load %arg12[%351, %c0_118, %c0_119] : memref<8x8x128xf32, #tpu.memory_space<vmem>>, vector<1x8x128xf32>
    %353 = vector.shape_cast %352 : vector<1x8x128xf32> to vector<8x128xf32>
    %354 = arith.truncf %350 : vector<8x128xf32> to vector<8x128xbf16>
    %cst_120 = arith.constant dense<0.000000e+00> : vector<8x128xf32>
    %355 = tpu.matmul %354, %301, %cst_120 {dimension_numbers = #tpu.dot_dimension_numbers<[1], [0], [0], [1], [0, 0, 1, 1], [], []>} : vector<8x128xbf16>, vector<128x128xbf16>, vector<8x128xf32> -> vector<8x128xf32>
    %356 = arith.addf %353, %355 : vector<8x128xf32>
    %357 = math.tanh %356 : vector<8x128xf32>
    %c8_i32_121 = arith.constant 8 : i32
    %358 = arith.truncf %357 : vector<8x128xf32> to vector<8x128xbf16>
    %c0_122 = arith.constant 0 : index
    %c0_123 = arith.constant 0 : index
    %359 = vector.load %arg7[%c0_122, %c0_123] : memref<128x128xbf16, #tpu.memory_space<vmem>>, vector<128x128xbf16>
    %cst_124 = arith.constant dense<0.000000e+00> : vector<8x128xf32>
    %360 = tpu.matmul %358, %359, %cst_124 {dimension_numbers = #tpu.dot_dimension_numbers<[1], [0], [0], [1], [0, 0, 1, 1], [], []>} : vector<8x128xbf16>, vector<128x128xbf16>, vector<8x128xf32> -> vector<8x128xf32>
    %c0_125 = arith.constant 0 : index
    %c0_126 = arith.constant 0 : index
    %361 = vector.load %arg8[%c0_125, %c0_126] : memref<1x128xf32, #tpu.memory_space<vmem>>, vector<1x128xf32>
    %362 = vector.broadcast %361 : vector<1x128xf32> to vector<8x128xf32>
    %363 = arith.addf %360, %362 : vector<8x128xf32>
    %364 = arith.negf %363 : vector<8x128xf32>
    %365 = math.exp %364 : vector<8x128xf32>
    %cst_127 = arith.constant 1.000000e+00 : f32
    %366 = vector.broadcast %cst_127 : f32 to vector<8x128xf32>
    %367 = arith.addf %366, %365 : vector<8x128xf32>
    %368 = arith.divf %366, %367 : vector<8x128xf32>
    %c0_128 = arith.constant 0 : index
    %c0_129 = arith.constant 0 : index
    %369 = vector.load %arg9[%c0_128, %c0_129] : memref<8x128xf32, #tpu.memory_space<vmem>>, vector<8x128xf32>
    tpu.vector_store %arg9[%c0_128, %c0_129], %368 {strides = array<i32>} : memref<8x128xf32, #tpu.memory_space<vmem>>, vector<8x128xf32>,
    return
  }
}

</mosaic_0001>

<llo_original>
// kernel: tpu_custom_call.1
$region0: #{tpu_custom_call.1}
  #allocation0 [shape = 'u32[]', space=smem, size = 0x4, offset = 0x4, fixed_abs, tag = 'smem constant byte address 0x4 - core index']
  #allocation1 [shape = 'u32[72,128]{1,0:T(1,128)}', space=vmem, size = 0x9000, scoped, tag = 'internal scratch']
  #allocation2 [shape = 'f32[8,8,512]{2,1,0:T(8,128)}', space=vmem, size = 0x20000, scoped, tag = 'scratch operand']
  #allocation3 [shape = 'f32[8,8,128]{2,1,0:T(8,128)}', space=vmem, size = 0x8000, scoped, tag = 'scratch operand']
  #allocation4 [shape = 'f32[8,8,128]{2,1,0:T(8,128)}', space=vmem, size = 0x8000, scoped, tag = 'scratch operand']
  %s0 = inlined_call_operand.hbm [shape: bf16[8,8,128], index: 0, kind: input, shape index: {}]
  %s1 = inlined_call_operand.hbm [shape: bf16[128,512], index: 1, kind: input, shape index: {}]
  %s2 = inlined_call_operand.hbm [shape: bf16[128,512], index: 2, kind: input, shape index: {}]
  %s3 = inlined_call_operand.hbm [shape: f32[1,512], index: 3, kind: input, shape index: {}]
  %s4 = inlined_call_operand.hbm [shape: bf16[128,128], index: 4, kind: input, shape index: {}]
  %s5 = inlined_call_operand.hbm [shape: bf16[128,128], index: 5, kind: input, shape index: {}]
  %s6 = inlined_call_operand.vmem [shape: f32[1,128], index: 6, kind: input, shape index: {}]
  %s7 = inlined_call_operand.hbm [shape: bf16[128,128], index: 7, kind: input, shape index: {}]
  %s8 = inlined_call_operand.vmem [shape: f32[1,128], index: 8, kind: input, shape index: {}]
  %s9 = inlined_call_operand.hbm [shape: f32[8,128], index: 9, kind: output, shape index: {}]
  %s10 = sld [smem:[#allocation0]]
  $region74: #{tpu_custom_call.1} parent=0
    _
  %s12 = ssub.s32 1, %s10
  %s13 = scalar_select 0, %s12, %s10
  $region1: #{tpu_custom_call.1} parent=0
    #allocation5 [shape = 'u8[16384]{0}', space=vmem, size = 0x4000, scoped, tag = 'input window, operand 0, single buffered']
    #allocation6 [shape = 's32[1]{0}', space=sflag, size = 0x4, scoped, tag = 'scoped memory for tpu_custom_call.1']
    #allocation7 [shape = 's32[1]{0}', space=sflag, size = 0x4, scoped, tag = 'scoped memory for tpu_custom_call.1']
    #allocation8 [shape = 'u8[131072]{0}', space=vmem, size = 0x20000, scoped, tag = 'input window, operand 1, single buffered']
    #allocation9 [shape = 's32[1]{0}', space=sflag, size = 0x4, scoped, tag = 'scoped memory for tpu_custom_call.1']
    #allocation10 [shape = 'u8[131072]{0}', space=vmem, size = 0x20000, scoped, tag = 'input window, operand 2, single buffered']
    #allocation11 [shape = 'u8[2048]{0}', space=vmem, size = 0x800, scoped, tag = 'input window, operand 3, single buffered']
    #allocation12 [shape = 's32[1]{0}', space=sflag, size = 0x4, scoped, tag = 'scoped memory for tpu_custom_call.1']
    #allocation13 [shape = 'u8[32768]{0}', space=vmem, size = 0x8000, scoped, tag = 'input window, operand 4, single buffered']
    #allocation14 [shape = 'u8[32768]{0}', space=vmem, size = 0x8000, scoped, tag = 'input window, operand 5, single buffered']
    #allocation15 [shape = 's32[1]{0}', space=sflag, size = 0x4, scoped, tag = 'scoped memory for tpu_custom_call.1']
    #allocation16 [shape = 'u8[32768]{0}', space=vmem, size = 0x8000, scoped, tag = 'input window, operand 7, single buffered']
    #allocation17 [shape = 'u8[4096]{0}', space=vmem, size = 0x1000, scoped, tag = 'output window, operand 0, single buffered']
    %14 = vsyncpa [#allocation6], 0
    %15 = vsyncpa [#allocation9], 0
    %16 = vsyncpa [#allocation12], 0
    %17 = vsyncpa [#allocation15], 0
    %18 = vsyncpa [#allocation7], 0
    // Predicated region
    $region2: #{tpu_custom_call.1} parent=1 // pred_check
      _
    $region3: #{tpu_custom_call.1} parent=1 // pred_check_branch
      %20 = sbr.rel (0) target = $region5
    $region4: #{tpu_custom_call.1} parent=1 // pred_region
      %22 = vsyncadd [#allocation6], 0
      %s23 = sshll.u32 %s0, 4
      %s24 = int_to_ptr.hbm [resolvable:$true] %s23
      %s25 = sshll.u32 [#allocation5], 4
      %s26 = int_to_ptr.vmem [resolvable:$true] %s25
      %31 = dma.hbm_to_vmem [thread:$0]  %s24, 512, %s26, [#allocation6], 64, 64, 4
    $region5: #{tpu_custom_call.1} parent=1 // pred_fallthru
      _
    // Predicated region
    $region6: #{tpu_custom_call.1} parent=1 // pred_check
      _
    $region7: #{tpu_custom_call.1} parent=1 // pred_check_branch
      %33 = sbr.rel (0) target = $region9
    $region8: #{tpu_custom_call.1} parent=1 // pred_region
      %35 = vsyncadd [#allocation9], 0
      %s36 = sshll.u32 %s1, 4
      %s37 = int_to_ptr.hbm [resolvable:$true] %s36
      %s38 = sshll.u32 [#allocation8], 4
      %s39 = int_to_ptr.vmem [resolvable:$true] %s38
      %44 = dma.hbm_to_vmem [thread:$0]  %s37, 4096, %s39, [#allocation9], 256, 256, 16
    $region9: #{tpu_custom_call.1} parent=1 // pred_fallthru
      _
    // Predicated region
    $region10: #{tpu_custom_call.1} parent=1 // pred_check
      _
    $region11: #{tpu_custom_call.1} parent=1 // pred_check_branch
      %46 = sbr.rel (0) target = $region13
    $region12: #{tpu_custom_call.1} parent=1 // pred_region
      %48 = vsyncadd [#allocation9], 0
      %s49 = sshll.u32 %s2, 4
      %s50 = int_to_ptr.hbm [resolvable:$true] %s49
      %s51 = sshll.u32 [#allocation10], 4
      %s52 = int_to_ptr.vmem [resolvable:$true] %s51
      %57 = dma.hbm_to_vmem [thread:$0]  %s50, 4096, %s52, [#allocation9], 256, 256, 16
    $region13: #{tpu_custom_call.1} parent=1 // pred_fallthru
      _
    // Predicated region
    $region14: #{tpu_custom_call.1} parent=1 // pred_check
      _
    $region15: #{tpu_custom_call.1} parent=1 // pred_check_branch
      %59 = sbr.rel (0) target = $region17
    $region16: #{tpu_custom_call.1} parent=1 // pred_region
      %61 = vsyncadd [#allocation12], 0
      %s63 = sshll.u32 %s3, 4
      %s64 = int_to_ptr.hbm [resolvable:$true] %s63
      %s65 = sshll.u32 [#allocation11], 4
      %s66 = int_to_ptr.vmem [resolvable:$true] %s65
      %68 = dma.hbm_to_vmem [thread:$0]  %s64, 64, %s66, [#allocation12]
    $region17: #{tpu_custom_call.1} parent=1 // pred_fallthru
      _
    // Predicated region
    $region18: #{tpu_custom_call.1} parent=1 // pred_check
      _
    $region19: #{tpu_custom_call.1} parent=1 // pred_check_branch
      %70 = sbr.rel (0) target = $region21
    $region20: #{tpu_custom_call.1} parent=1 // pred_region
      %72 = vsyncadd [#allocation12], 0
      %s73 = sshll.u32 %s4, 4
      %s74 = int_to_ptr.hbm [resolvable:$true] %s73
      %s75 = sshll.u32 [#allocation13], 4
      %s76 = int_to_ptr.vmem [resolvable:$true] %s75
      %81 = dma.hbm_to_vmem [thread:$0]  %s74, 1024, %s76, [#allocation12], 64, 64, 4
    $region21: #{tpu_custom_call.1} parent=1 // pred_fallthru
      _
    // Predicated region
    $region22: #{tpu_custom_call.1} parent=1 // pred_check
      _
    $region23: #{tpu_custom_call.1} parent=1 // pred_check_branch
      %83 = sbr.rel (0) target = $region25
    $region24: #{tpu_custom_call.1} parent=1 // pred_region
      %85 = vsyncadd [#allocation15], 0
      %s86 = sshll.u32 %s5, 4
      %s87 = int_to_ptr.hbm [resolvable:$true] %s86
      %s88 = sshll.u32 [#allocation14], 4
      %s89 = int_to_ptr.vmem [resolvable:$true] %s88
      %94 = dma.hbm_to_vmem [thread:$0]  %s87, 1024, %s89, [#allocation15], 64, 64, 4
    $region25: #{tpu_custom_call.1} parent=1 // pred_fallthru
      _
    // Predicated region
    $region26: #{tpu_custom_call.1} parent=1 // pred_check
      _
    $region27: #{tpu_custom_call.1} parent=1 // pred_check_branch
      %96 = sbr.rel (0) target = $region29
    $region28: #{tpu_custom_call.1} parent=1 // pred_region
      _
    $region29: #{tpu_custom_call.1} parent=1 // pred_fallthru
      _
    // Predicated region
    $region30: #{tpu_custom_call.1} parent=1 // pred_check
      _
    $region31: #{tpu_custom_call.1} parent=1 // pred_check_branch
      %98 = sbr.rel (0) target = $region33
    $region32: #{tpu_custom_call.1} parent=1 // pred_region
      %100 = vsyncadd [#allocation15], 0
      %s101 = sshll.u32 %s7, 4
      %s102 = int_to_ptr.hbm [resolvable:$true] %s101
      %s103 = sshll.u32 [#allocation16], 4
      %s104 = int_to_ptr.vmem [resolvable:$true] %s103
      %109 = dma.hbm_to_vmem [thread:$0]  %s102, 1024, %s104, [#allocation15], 64, 64, 4
    $region33: #{tpu_custom_call.1} parent=1 // pred_fallthru
      _
    // Predicated region
    $region34: #{tpu_custom_call.1} parent=1 // pred_check
      _
    $region35: #{tpu_custom_call.1} parent=1 // pred_check_branch
      %111 = sbr.rel (0) target = $region37
    $region36: #{tpu_custom_call.1} parent=1 // pred_region
      _
    $region37: #{tpu_custom_call.1} parent=1 // pred_fallthru
      _
    // Predicated region
    $region38: #{tpu_custom_call.1} parent=1 // pred_check
      _
    $region39: #{tpu_custom_call.1} parent=1 // pred_check_branch
      %113 = sbr.rel (0) target = $region41
    $region40: #{tpu_custom_call.1} parent=1 // pred_region
      %115 = dma.done [#allocation6], 512
    $region41: #{tpu_custom_call.1} parent=1 // pred_fallthru
      _
    // Predicated region
    $region42: #{tpu_custom_call.1} parent=1 // pred_check
      _
    $region43: #{tpu_custom_call.1} parent=1 // pred_check_branch
      %117 = sbr.rel (0) target = $region45
    $region44: #{tpu_custom_call.1} parent=1 // pred_region
      %119 = dma.done [#allocation9], 4096
    $region45: #{tpu_custom_call.1} parent=1 // pred_fallthru
      _
    // Predicated region
    $region46: #{tpu_custom_call.1} parent=1 // pred_check
      _
    $region47: #{tpu_custom_call.1} parent=1 // pred_check_branch
      %121 = sbr.rel (0) target = $region49
    $region48: #{tpu_custom_call.1} parent=1 // pred_region
      %123 = dma.done [#allocation9], 4096
    $region49: #{tpu_custom_call.1} parent=1 // pred_fallthru
      _
    // Predicated region
    $region50: #{tpu_custom_call.1} parent=1 // pred_check
      _
    $region51: #{tpu_custom_call.1} parent=1 // pred_check_branch
      %125 = sbr.rel (0) target = $region53
    $region52: #{tpu_custom_call.1} parent=1 // pred_region
      %127 = dma.done [#allocation12], 64
    $region53: #{tpu_custom_call.1} parent=1 // pred_fallthru
      _
    // Predicated region
    $region54: #{tpu_custom_call.1} parent=1 // pred_check
      _
    $region55: #{tpu_custom_call.1} parent=1 // pred_check_branch
      %129 = sbr.rel (0) target = $region57
    $region56: #{tpu_custom_call.1} parent=1 // pred_region
      %131 = dma.done [#allocation12], 1024
    $region57: #{tpu_custom_call.1} parent=1 // pred_fallthru
      _
    // Predicated region
    $region58: #{tpu_custom_call.1} parent=1 // pred_check
      _
    $region59: #{tpu_custom_call.1} parent=1 // pred_check_branch
      %133 = sbr.rel (0) target = $region61
    $region60: #{tpu_custom_call.1} parent=1 // pred_region
      %135 = dma.done [#allocation15], 1024
    $region61: #{tpu_custom_call.1} parent=1 // pred_fallthru
      _
    // Predicated region
    $region62: #{tpu_custom_call.1} parent=1 // pred_check
      _
    $region63: #{tpu_custom_call.1} parent=1 // pred_check_branch
      %137 = sbr.rel (0) target = $region65
    $region64: #{tpu_custom_call.1} parent=1 // pred_region
      %139 = dma.done [#allocation15], 1024
    $region65: #{tpu_custom_call.1} parent=1 // pred_fallthru
      _
    %v141 = vld [vmem:[#allocation5] sm:$0xf]
    %v142 = vld [vmem:[#allocation5 + $0x4] sm:$0xf]
    %v143 = vld [vmem:[#allocation5 + $0x8] sm:$0xf]
    %v144 = vld [vmem:[#allocation5 + $0xc] sm:$0xf]
    %v145 = vld [vmem:[#allocation5 + $0x10] sm:$0xf]
    %v146 = vld [vmem:[#allocation5 + $0x14] sm:$0xf]
    %v147 = vld [vmem:[#allocation5 + $0x18] sm:$0xf]
    %v148 = vld [vmem:[#allocation5 + $0x1c] sm:$0xf]
    %v149 = vld [vmem:[#allocation8] sm:$0xff]
    %v150 = vld [vmem:[#allocation8 + $0x8] sm:$0xff]
    %v151 = vld [vmem:[#allocation8 + $0x10] sm:$0xff]
    %v152 = vld [vmem:[#allocation8 + $0x18] sm:$0xff]
    %v153 = vld [vmem:[#allocation8 + $0x20] sm:$0xff]
    %v154 = vld [vmem:[#allocation8 + $0x28] sm:$0xff]
    %v155 = vld [vmem:[#allocation8 + $0x30] sm:$0xff]
    %v156 = vld [vmem:[#allocation8 + $0x38] sm:$0xff]
    %v157 = vld [vmem:[#allocation8 + $0x40] sm:$0xff]
    %v158 = vld [vmem:[#allocation8 + $0x48] sm:$0xff]
    %v159 = vld [vmem:[#allocation8 + $0x50] sm:$0xff]
    %v160 = vld [vmem:[#allocation8 + $0x58] sm:$0xff]
    %v161 = vld [vmem:[#allocation8 + $0x60] sm:$0xff]
    %v162 = vld [vmem:[#allocation8 + $0x68] sm:$0xff]
    %v163 = vld [vmem:[#allocation8 + $0x70] sm:$0xff]
    %v164 = vld [vmem:[#allocation8 + $0x78] sm:$0xff]
    %v165 = vld [vmem:[#allocation8 + $0x80] sm:$0xff]
    %v166 = vld [vmem:[#allocation8 + $0x88] sm:$0xff]
    %v167 = vld [vmem:[#allocation8 + $0x90] sm:$0xff]
    %v168 = vld [vmem:[#allocation8 + $0x98] sm:$0xff]
    %v169 = vld [vmem:[#allocation8 + $0xa0] sm:$0xff]
    %v170 = vld [vmem:[#allocation8 + $0xa8] sm:$0xff]
    %v171 = vld [vmem:[#allocation8 + $0xb0] sm:$0xff]
    %v172 = vld [vmem:[#allocation8 + $0xb8] sm:$0xff]
    %v173 = vld [vmem:[#allocation8 + $0xc0] sm:$0xff]
    %v174 = vld [vmem:[#allocation8 + $0xc8] sm:$0xff]
    %v175 = vld [vmem:[#allocation8 + $0xd0] sm:$0xff]
    %v176 = vld [vmem:[#allocation8 + $0xd8] sm:$0xff]
    %v177 = vld [vmem:[#allocation8 + $0xe0] sm:$0xff]
    %v178 = vld [vmem:[#allocation8 + $0xe8] sm:$0xff]
    %v179 = vld [vmem:[#allocation8 + $0xf0] sm:$0xff]
    %v180 = vld [vmem:[#allocation8 + $0xf8] sm:$0xff]
    %v181 = vld [vmem:[#allocation11] sm:$0xf]
    %v183 = vperm.slane %v181, 0
    %v184 = vperm.slane %v181, 1
    %v185 = vperm.slane %v181, 2
    %v186 = vperm.slane %v181, 3
    %v199 = vunpack.c.l.b16 %v141
    %v200 = vunpack.c.l.b16 %v142
    %v201 = vunpack.c.l.b16 %v143
    %v202 = vunpack.c.l.b16 %v144
    %v203 = vunpack.c.l.b16 %v145
    %v204 = vunpack.c.l.b16 %v146
    %v205 = vunpack.c.l.b16 %v147
    %v206 = vunpack.c.l.b16 %v148
    %v207 = vpack.c.b16 %v200, %v199
    %v208 = vpack.c.b16 %v202, %v201
    %v209 = vpack.c.b16 %v204, %v203
    %v210 = vpack.c.b16 %v206, %v205
    %v247 = vunpack.c.l.b16 %v149
    %v248 = vunpack.c.h.b16 %v149
    %v249 = vunpack.c.l.b16 %v150
    %v250 = vunpack.c.h.b16 %v150
    %v251 = vunpack.c.l.b16 %v151
    %v252 = vunpack.c.h.b16 %v151
    %v253 = vunpack.c.l.b16 %v152
    %v254 = vunpack.c.h.b16 %v152
    %v255 = vunpack.c.l.b16 %v153
    %v256 = vunpack.c.h.b16 %v153
    %v257 = vunpack.c.l.b16 %v154
    %v258 = vunpack.c.h.b16 %v154
    %v259 = vunpack.c.l.b16 %v155
    %v260 = vunpack.c.h.b16 %v155
    %v261 = vunpack.c.l.b16 %v156
    %v262 = vunpack.c.h.b16 %v156
    %v263 = vunpack.c.l.b16 %v157
    %v264 = vunpack.c.h.b16 %v157
    %v265 = vunpack.c.l.b16 %v158
    %v266 = vunpack.c.h.b16 %v158
    %v267 = vunpack.c.l.b16 %v159
    %v268 = vunpack.c.h.b16 %v159
    %v269 = vunpack.c.l.b16 %v160
    %v270 = vunpack.c.h.b16 %v160
    %v271 = vunpack.c.l.b16 %v161
    %v272 = vunpack.c.h.b16 %v161
    %v273 = vunpack.c.l.b16 %v162
    %v274 = vunpack.c.h.b16 %v162
    %v275 = vunpack.c.l.b16 %v163
    %v276 = vunpack.c.h.b16 %v163
    %v277 = vunpack.c.l.b16 %v164
    %v278 = vunpack.c.h.b16 %v164
    %v279 = vunpack.c.l.b16 %v165
    %v280 = vunpack.c.h.b16 %v165
    %v281 = vunpack.c.l.b16 %v166
    %v282 = vunpack.c.h.b16 %v166
    %v283 = vunpack.c.l.b16 %v167
    %v284 = vunpack.c.h.b16 %v167
    %v285 = vunpack.c.l.b16 %v168
    %v286 = vunpack.c.h.b16 %v168
    %v287 = vunpack.c.l.b16 %v169
    %v288 = vunpack.c.h.b16 %v169
    %v289 = vunpack.c.l.b16 %v170
    %v290 = vunpack.c.h.b16 %v170
    %v291 = vunpack.c.l.b16 %v171
    %v292 = vunpack.c.h.b16 %v171
    %v293 = vunpack.c.l.b16 %v172
    %v294 = vunpack.c.h.b16 %v172
    %v295 = vunpack.c.l.b16 %v173
    %v296 = vunpack.c.h.b16 %v173
    %v297 = vunpack.c.l.b16 %v174
    %v298 = vunpack.c.h.b16 %v174
    %v299 = vunpack.c.l.b16 %v175
    %v300 = vunpack.c.h.b16 %v175
    %v301 = vunpack.c.l.b16 %v176
    %v302 = vunpack.c.h.b16 %v176
    %v303 = vunpack.c.l.b16 %v177
    %v304 = vunpack.c.h.b16 %v177
    %v305 = vunpack.c.l.b16 %v178
    %v306 = vunpack.c.h.b16 %v178
    %v307 = vunpack.c.l.b16 %v179
    %v308 = vunpack.c.h.b16 %v179
    %v309 = vunpack.c.l.b16 %v180
    %v310 = vunpack.c.h.b16 %v180
    %v311 = vpack.c.b16 %v251, %v247
    %v312 = vpack.c.b16 %v252, %v248
    %v313 = vpack.c.b16 %v253, %v249
    %v314 = vpack.c.b16 %v254, %v250
    %v315 = vpack.c.b16 %v259, %v255
    %v316 = vpack.c.b16 %v260, %v256
    %v317 = vpack.c.b16 %v261, %v257
    %v318 = vpack.c.b16 %v262, %v258
    %v319 = vpack.c.b16 %v267, %v263
    %v320 = vpack.c.b16 %v268, %v264
    %v321 = vpack.c.b16 %v269, %v265
    %v322 = vpack.c.b16 %v270, %v266
    %v323 = vpack.c.b16 %v275, %v271
    %v324 = vpack.c.b16 %v276, %v272
    %v325 = vpack.c.b16 %v277, %v273
    %v326 = vpack.c.b16 %v278, %v274
    %v327 = vpack.c.b16 %v283, %v279
    %v328 = vpack.c.b16 %v284, %v280
    %v329 = vpack.c.b16 %v285, %v281
    %v330 = vpack.c.b16 %v286, %v282
    %v331 = vpack.c.b16 %v291, %v287
    %v332 = vpack.c.b16 %v292, %v288
    %v333 = vpack.c.b16 %v293, %v289
    %v334 = vpack.c.b16 %v294, %v290
    %v335 = vpack.c.b16 %v299, %v295
    %v336 = vpack.c.b16 %v300, %v296
    %v337 = vpack.c.b16 %v301, %v297
    %v338 = vpack.c.b16 %v302, %v298
    %v339 = vpack.c.b16 %v307, %v303
    %v340 = vpack.c.b16 %v308, %v304
    %v341 = vpack.c.b16 %v309, %v305
    %v342 = vpack.c.b16 %v310, %v306
    %375 = vmatpush.bf16.msra.mxu0 %v339
    %376 = vmatpush.bf16.msra.mxu0 %v335
    %377 = vmatpush.bf16.msra.mxu0 %v331
    %378 = vmatpush.bf16.msra.mxu0 %v327
    %379 = vmatpush.bf16.msra.mxu0 %v323
    %380 = vmatpush.bf16.msra.mxu0 %v319
    %381 = vmatpush.bf16.msra.mxu0 %v315
    %382 = vmatpush.bf16.msra.mxu0 %v311
    %383 = vmatmul.bf16.gmra.mxu0 %v207
    %v384 = vpop.f32.mrf.mxu0
    %v385 = vadd.f32 %v183, %v384
    %v386 = vpop.f32.mrf.mxu0
    %v387 = vadd.f32 %v183, %v386
    %388 = vmatmul.bf16.gmra.mxu0 %v208
    %v389 = vpop.f32.mrf.mxu0
    %v390 = vadd.f32 %v183, %v389
    %v391 = vpop.f32.mrf.mxu0
    %v392 = vadd.f32 %v183, %v391
    %393 = vmatmul.bf16.gmra.mxu0 %v209
    %v394 = vpop.f32.mrf.mxu0
    %v395 = vadd.f32 %v183, %v394
    %v396 = vpop.f32.mrf.mxu0
    %v397 = vadd.f32 %v183, %v396
    %398 = vmatmul.bf16.gmra.mxu0 %v210
    %v399 = vpop.f32.mrf.mxu0
    %v400 = vadd.f32 %v183, %v399
    %v401 = vpop.f32.mrf.mxu0
    %v402 = vadd.f32 %v183, %v401
    %403 = vdwg.mxu0
    %404 = vmatpush.bf16.msra.mxu0 %v340
    %405 = vmatpush.bf16.msra.mxu0 %v336
    %406 = vmatpush.bf16.msra.mxu0 %v332
    %407 = vmatpush.bf16.msra.mxu0 %v328
    %408 = vmatpush.bf16.msra.mxu0 %v324
    %409 = vmatpush.bf16.msra.mxu0 %v320
    %410 = vmatpush.bf16.msra.mxu0 %v316
    %411 = vmatpush.bf16.msra.mxu0 %v312
    %412 = vmatmul.bf16.gmra.mxu0 %v207
    %v413 = vpop.f32.mrf.mxu0
    %v414 = vadd.f32 %v184, %v413
    %v415 = vpop.f32.mrf.mxu0
    %v416 = vadd.f32 %v184, %v415
    %417 = vmatmul.bf16.gmra.mxu0 %v208
    %v418 = vpop.f32.mrf.mxu0
    %v419 = vadd.f32 %v184, %v418
    %v420 = vpop.f32.mrf.mxu0
    %v421 = vadd.f32 %v184, %v420
    %422 = vmatmul.bf16.gmra.mxu0 %v209
    %v423 = vpop.f32.mrf.mxu0
    %v424 = vadd.f32 %v184, %v423
    %v425 = vpop.f32.mrf.mxu0
    %v426 = vadd.f32 %v184, %v425
    %427 = vmatmul.bf16.gmra.mxu0 %v210
    %v428 = vpop.f32.mrf.mxu0
    %v429 = vadd.f32 %v184, %v428
    %v430 = vpop.f32.mrf.mxu0
    %v431 = vadd.f32 %v184, %v430
    %432 = vdwg.mxu0
    %433 = vmatpush.bf16.msra.mxu0 %v341
    %434 = vmatpush.bf16.msra.mxu0 %v337
    %435 = vmatpush.bf16.msra.mxu0 %v333
    %436 = vmatpush.bf16.msra.mxu0 %v329
    %437 = vmatpush.bf16.msra.mxu0 %v325
    %438 = vmatpush.bf16.msra.mxu0 %v321
    %439 = vmatpush.bf16.msra.mxu0 %v317
    %440 = vmatpush.bf16.msra.mxu0 %v313
    %441 = vmatmul.bf16.gmra.mxu0 %v207
    %v442 = vpop.f32.mrf.mxu0
    %v443 = vadd.f32 %v185, %v442
    %v444 = vpop.f32.mrf.mxu0
    %v445 = vadd.f32 %v185, %v444
    %446 = vmatmul.bf16.gmra.mxu0 %v208
    %v447 = vpop.f32.mrf.mxu0
    %v448 = vadd.f32 %v185, %v447
    %v449 = vpop.f32.mrf.mxu0
    %v450 = vadd.f32 %v185, %v449
    %451 = vmatmul.bf16.gmra.mxu0 %v209
    %v452 = vpop.f32.mrf.mxu0
    %v453 = vadd.f32 %v185, %v452
    %v454 = vpop.f32.mrf.mxu0
    %v455 = vadd.f32 %v185, %v454
    %456 = vmatmul.bf16.gmra.mxu0 %v210
    %v457 = vpop.f32.mrf.mxu0
    %v458 = vadd.f32 %v185, %v457
    %v459 = vpop.f32.mrf.mxu0
    %v460 = vadd.f32 %v185, %v459
    %461 = vdwg.mxu0
    %462 = vmatpush.bf16.msra.mxu0 %v342
    %463 = vmatpush.bf16.msra.mxu0 %v338
    %464 = vmatpush.bf16.msra.mxu0 %v334
    %465 = vmatpush.bf16.msra.mxu0 %v330
    %466 = vmatpush.bf16.msra.mxu0 %v326
    %467 = vmatpush.bf16.msra.mxu0 %v322
    %468 = vmatpush.bf16.msra.mxu0 %v318
    %469 = vmatpush.bf16.msra.mxu0 %v314
    %470 = vmatmul.bf16.gmra.mxu0 %v207
    %v471 = vpop.f32.mrf.mxu0
    %v472 = vadd.f32 %v186, %v471
    %v473 = vpop.f32.mrf.mxu0
    %v474 = vadd.f32 %v186, %v473
    %475 = vmatmul.bf16.gmra.mxu0 %v208
    %v476 = vpop.f32.mrf.mxu0
    %v477 = vadd.f32 %v186, %v476
    %v478 = vpop.f32.mrf.mxu0
    %v479 = vadd.f32 %v186, %v478
    %480 = vmatmul.bf16.gmra.mxu0 %v209
    %v481 = vpop.f32.mrf.mxu0
    %v482 = vadd.f32 %v186, %v481
    %v483 = vpop.f32.mrf.mxu0
    %v484 = vadd.f32 %v186, %v483
    %485 = vmatmul.bf16.gmra.mxu0 %v210
    %v486 = vpop.f32.mrf.mxu0
    %v487 = vadd.f32 %v186, %v486
    %v488 = vpop.f32.mrf.mxu0
    %v489 = vadd.f32 %v186, %v488
    %490 = vdwg.mxu0
    %491 = vst [vmem:[#allocation2] sm:$0xff] %v385
    %492 = vst [vmem:[#allocation2 + $0x8] sm:$0xff] %v414
    %493 = vst [vmem:[#allocation2 + $0x10] sm:$0xff] %v443
    %494 = vst [vmem:[#allocation2 + $0x18] sm:$0xff] %v472
    %495 = vst [vmem:[#allocation2 + $0x20] sm:$0xff] %v387
    %496 = vst [vmem:[#allocation2 + $0x28] sm:$0xff] %v416
    %497 = vst [vmem:[#allocation2 + $0x30] sm:$0xff] %v445
    %498 = vst [vmem:[#allocation2 + $0x38] sm:$0xff] %v474
    %499 = vst [vmem:[#allocation2 + $0x40] sm:$0xff] %v390
    %500 = vst [vmem:[#allocation2 + $0x48] sm:$0xff] %v419
    %501 = vst [vmem:[#allocation2 + $0x50] sm:$0xff] %v448
    %502 = vst [vmem:[#allocation2 + $0x58] sm:$0xff] %v477
    %503 = vst [vmem:[#allocation2 + $0x60] sm:$0xff] %v392
    %504 = vst [vmem:[#allocation2 + $0x68] sm:$0xff] %v421
    %505 = vst [vmem:[#allocation2 + $0x70] sm:$0xff] %v450
    %506 = vst [vmem:[#allocation2 + $0x78] sm:$0xff] %v479
    %507 = vst [vmem:[#allocation2 + $0x80] sm:$0xff] %v395
    %508 = vst [vmem:[#allocation2 + $0x88] sm:$0xff] %v424
    %509 = vst [vmem:[#allocation2 + $0x90] sm:$0xff] %v453
    %510 = vst [vmem:[#allocation2 + $0x98] sm:$0xff] %v482
    %511 = vst [vmem:[#allocation2 + $0xa0] sm:$0xff] %v397
    %512 = vst [vmem:[#allocation2 + $0xa8] sm:$0xff] %v426
    %513 = vst [vmem:[#allocation2 + $0xb0] sm:$0xff] %v455
    %514 = vst [vmem:[#allocation2 + $0xb8] sm:$0xff] %v484
    %515 = vst [vmem:[#allocation2 + $0xc0] sm:$0xff] %v400
    %516 = vst [vmem:[#allocation2 + $0xc8] sm:$0xff] %v429
    %517 = vst [vmem:[#allocation2 + $0xd0] sm:$0xff] %v458
    %518 = vst [vmem:[#allocation2 + $0xd8] sm:$0xff] %v487
    %519 = vst [vmem:[#allocation2 + $0xe0] sm:$0xff] %v402
    %520 = vst [vmem:[#allocation2 + $0xe8] sm:$0xff] %v431
    %521 = vst [vmem:[#allocation2 + $0xf0] sm:$0xff] %v460
    %522 = vst [vmem:[#allocation2 + $0xf8] sm:$0xff] %v489
    %v523 = vld [vmem:[#allocation10] sm:$0xff]
    %v524 = vld [vmem:[#allocation10 + $0x8] sm:$0xff]
    %v525 = vld [vmem:[#allocation10 + $0x10] sm:$0xff]
    %v526 = vld [vmem:[#allocation10 + $0x18] sm:$0xff]
    %v527 = vld [vmem:[#allocation10 + $0x20] sm:$0xff]
    %v528 = vld [vmem:[#allocation10 + $0x28] sm:$0xff]
    %v529 = vld [vmem:[#allocation10 + $0x30] sm:$0xff]
    %v530 = vld [vmem:[#allocation10 + $0x38] sm:$0xff]
    %v531 = vld [vmem:[#allocation10 + $0x40] sm:$0xff]
    %v532 = vld [vmem:[#allocation10 + $0x48] sm:$0xff]
    %v533 = vld [vmem:[#allocation10 + $0x50] sm:$0xff]
    %v534 = vld [vmem:[#allocation10 + $0x58] sm:$0xff]
    %v535 = vld [vmem:[#allocation10 + $0x60] sm:$0xff]
    %v536 = vld [vmem:[#allocation10 + $0x68] sm:$0xff]
    %v537 = vld [vmem:[#allocation10 + $0x70] sm:$0xff]
    %v538 = vld [vmem:[#allocation10 + $0x78] sm:$0xff]
    %v539 = vld [vmem:[#allocation10 + $0x80] sm:$0xff]
    %v540 = vld [vmem:[#allocation10 + $0x88] sm:$0xff]
    %v541 = vld [vmem:[#allocation10 + $0x90] sm:$0xff]
    %v542 = vld [vmem:[#allocation10 + $0x98] sm:$0xff]
    %v543 = vld [vmem:[#allocation10 + $0xa0] sm:$0xff]
    %v544 = vld [vmem:[#allocation10 + $0xa8] sm:$0xff]
    %v545 = vld [vmem:[#allocation10 + $0xb0] sm:$0xff]
    %v546 = vld [vmem:[#allocation10 + $0xb8] sm:$0xff]
    %v547 = vld [vmem:[#allocation10 + $0xc0] sm:$0xff]
    %v548 = vld [vmem:[#allocation10 + $0xc8] sm:$0xff]
    %v549 = vld [vmem:[#allocation10 + $0xd0] sm:$0xff]
    %v550 = vld [vmem:[#allocation10 + $0xd8] sm:$0xff]
    %v551 = vld [vmem:[#allocation10 + $0xe0] sm:$0xff]
    %v552 = vld [vmem:[#allocation10 + $0xe8] sm:$0xff]
    %v553 = vld [vmem:[#allocation10 + $0xf0] sm:$0xff]
    %v554 = vld [vmem:[#allocation10 + $0xf8] sm:$0xff]
    %v555 = vld [vmem:[#allocation2] sm:$0xff]
    %v556 = vld [vmem:[#allocation2 + $0x8] sm:$0xff]
    %v557 = vld [vmem:[#allocation2 + $0x10] sm:$0xff]
    %v558 = vld [vmem:[#allocation2 + $0x18] sm:$0xff]
    %v591 = vunpack.c.l.b16 %v523
    %v592 = vunpack.c.h.b16 %v523
    %v593 = vunpack.c.l.b16 %v524
    %v594 = vunpack.c.h.b16 %v524
    %v595 = vunpack.c.l.b16 %v525
    %v596 = vunpack.c.h.b16 %v525
    %v597 = vunpack.c.l.b16 %v526
    %v598 = vunpack.c.h.b16 %v526
    %v599 = vunpack.c.l.b16 %v527
    %v600 = vunpack.c.h.b16 %v527
    %v601 = vunpack.c.l.b16 %v528
    %v602 = vunpack.c.h.b16 %v528
    %v603 = vunpack.c.l.b16 %v529
    %v604 = vunpack.c.h.b16 %v529
    %v605 = vunpack.c.l.b16 %v530
    %v606 = vunpack.c.h.b16 %v530
    %v607 = vunpack.c.l.b16 %v531
    %v608 = vunpack.c.h.b16 %v531
    %v609 = vunpack.c.l.b16 %v532
    %v610 = vunpack.c.h.b16 %v532
    %v611 = vunpack.c.l.b16 %v533
    %v612 = vunpack.c.h.b16 %v533
    %v613 = vunpack.c.l.b16 %v534
    %v614 = vunpack.c.h.b16 %v534
    %v615 = vunpack.c.l.b16 %v535
    %v616 = vunpack.c.h.b16 %v535
    %v617 = vunpack.c.l.b16 %v536
    %v618 = vunpack.c.h.b16 %v536
    %v619 = vunpack.c.l.b16 %v537
    %v620 = vunpack.c.h.b16 %v537
    %v621 = vunpack.c.l.b16 %v538
    %v622 = vunpack.c.h.b16 %v538
    %v623 = vunpack.c.l.b16 %v539
    %v624 = vunpack.c.h.b16 %v539
    %v625 = vunpack.c.l.b16 %v540
    %v626 = vunpack.c.h.b16 %v540
    %v627 = vunpack.c.l.b16 %v541
    %v628 = vunpack.c.h.b16 %v541
    %v629 = vunpack.c.l.b16 %v542
    %v630 = vunpack.c.h.b16 %v542
    %v631 = vunpack.c.l.b16 %v543
    %v632 = vunpack.c.h.b16 %v543
    %v633 = vunpack.c.l.b16 %v544
    %v634 = vunpack.c.h.b16 %v544
    %v635 = vunpack.c.l.b16 %v545
    %v636 = vunpack.c.h.b16 %v545
    %v637 = vunpack.c.l.b16 %v546
    %v638 = vunpack.c.h.b16 %v546
    %v639 = vunpack.c.l.b16 %v547
    %v640 = vunpack.c.h.b16 %v547
    %v641 = vunpack.c.l.b16 %v548
    %v642 = vunpack.c.h.b16 %v548
    %v643 = vunpack.c.l.b16 %v549
    %v644 = vunpack.c.h.b16 %v549
    %v645 = vunpack.c.l.b16 %v550
    %v646 = vunpack.c.h.b16 %v550
    %v647 = vunpack.c.l.b16 %v551
    %v648 = vunpack.c.h.b16 %v551
    %v649 = vunpack.c.l.b16 %v552
    %v650 = vunpack.c.h.b16 %v552
    %v651 = vunpack.c.l.b16 %v553
    %v652 = vunpack.c.h.b16 %v553
    %v653 = vunpack.c.l.b16 %v554
    %v654 = vunpack.c.h.b16 %v554
    %v655 = vpack.c.b16 %v595, %v591
    %v656 = vpack.c.b16 %v596, %v592
    %v657 = vpack.c.b16 %v597, %v593
    %v658 = vpack.c.b16 %v598, %v594
    %v659 = vpack.c.b16 %v603, %v599
    %v660 = vpack.c.b16 %v604, %v600
    %v661 = vpack.c.b16 %v605, %v601
    %v662 = vpack.c.b16 %v606, %v602
    %v663 = vpack.c.b16 %v611, %v607
    %v664 = vpack.c.b16 %v612, %v608
    %v665 = vpack.c.b16 %v613, %v609
    %v666 = vpack.c.b16 %v614, %v610
    %v667 = vpack.c.b16 %v619, %v615
    %v668 = vpack.c.b16 %v620, %v616
    %v669 = vpack.c.b16 %v621, %v617
    %v670 = vpack.c.b16 %v622, %v618
    %v671 = vpack.c.b16 %v627, %v623
    %v672 = vpack.c.b16 %v628, %v624
    %v673 = vpack.c.b16 %v629, %v625
    %v674 = vpack.c.b16 %v630, %v626
    %v675 = vpack.c.b16 %v635, %v631
    %v676 = vpack.c.b16 %v636, %v632
    %v677 = vpack.c.b16 %v637, %v633
    %v678 = vpack.c.b16 %v638, %v634
    %v679 = vpack.c.b16 %v643, %v639
    %v680 = vpack.c.b16 %v644, %v640
    %v681 = vpack.c.b16 %v645, %v641
    %v682 = vpack.c.b16 %v646, %v642
    %v683 = vpack.c.b16 %v651, %v647
    %v684 = vpack.c.b16 %v652, %v648
    %v685 = vpack.c.b16 %v653, %v649
    %v686 = vpack.c.b16 %v654, %v650
    %719 = vmatpush.bf16.msra.mxu0 %v683
    %720 = vmatpush.bf16.msra.mxu0 %v679
    %721 = vmatpush.bf16.msra.mxu0 %v675
    %722 = vmatpush.bf16.msra.mxu0 %v671
    %723 = vmatpush.bf16.msra.mxu0 %v667
    %724 = vmatpush.bf16.msra.mxu0 %v663
    %725 = vmatpush.bf16.msra.mxu0 %v659
    %726 = vmatpush.bf16.msra.mxu0 %v655
    %727 = vmatmul.bf16.gmra.mxu0 0
    %v728 = vpop.f32.mrf.mxu0
    %v729 = vadd.f32 0.0, %v728
    %v730 = vpop.f32.mrf.mxu0
    %731 = vdwg.mxu0
    %732 = vmatpush.bf16.msra.mxu0 %v684
    %733 = vmatpush.bf16.msra.mxu0 %v680
    %734 = vmatpush.bf16.msra.mxu0 %v676
    %735 = vmatpush.bf16.msra.mxu0 %v672
    %736 = vmatpush.bf16.msra.mxu0 %v668
    %737 = vmatpush.bf16.msra.mxu0 %v664
    %738 = vmatpush.bf16.msra.mxu0 %v660
    %739 = vmatpush.bf16.msra.mxu0 %v656
    %740 = vmatmul.bf16.gmra.mxu0 0
    %v741 = vpop.f32.mrf.mxu0
    %v742 = vadd.f32 0.0, %v741
    %v743 = vpop.f32.mrf.mxu0
    %744 = vdwg.mxu0
    %745 = vmatpush.bf16.msra.mxu0 %v685
    %746 = vmatpush.bf16.msra.mxu0 %v681
    %747 = vmatpush.bf16.msra.mxu0 %v677
    %748 = vmatpush.bf16.msra.mxu0 %v673
    %749 = vmatpush.bf16.msra.mxu0 %v669
    %750 = vmatpush.bf16.msra.mxu0 %v665
    %751 = vmatpush.bf16.msra.mxu0 %v661
    %752 = vmatpush.bf16.msra.mxu0 %v657
    %753 = vmatmul.bf16.gmra.mxu0 0
    %v754 = vpop.f32.mrf.mxu0
    %v755 = vadd.f32 0.0, %v754
    %v756 = vpop.f32.mrf.mxu0
    %757 = vdwg.mxu0
    %758 = vmatpush.bf16.msra.mxu0 %v686
    %759 = vmatpush.bf16.msra.mxu0 %v682
    %760 = vmatpush.bf16.msra.mxu0 %v678
    %761 = vmatpush.bf16.msra.mxu0 %v674
    %762 = vmatpush.bf16.msra.mxu0 %v670
    %763 = vmatpush.bf16.msra.mxu0 %v666
    %764 = vmatpush.bf16.msra.mxu0 %v662
    %765 = vmatpush.bf16.msra.mxu0 %v658
    %766 = vmatmul.bf16.gmra.mxu0 0
    %v767 = vpop.f32.mrf.mxu0
    %v768 = vadd.f32 0.0, %v767
    %v769 = vpop.f32.mrf.mxu0
    %770 = vdwg.mxu0
    %v771 = vadd.f32 %v555, %v729
    %v772 = vadd.f32 %v556, %v742
    %v773 = vadd.f32 %v557, %v755
    %v774 = vadd.f32 %v558, %v768
    %v775 = vxor.u32 %v771, 2147483648
    %v776 = vmul.f32 %v775, 1.442695
    %v777 = vpow.pop %v776
    %v778 = vadd.f32 %v777, 1.0
    %v779 = vrcp.pop %v778
    %v780 = vmul.f32 %v778, %v779
    %v781 = vsub.f32 1.0, %v780
    %v782 = vmul.f32 %v779, %v781
    %v783 = vadd.f32 %v779, %v782
    %vm784 = vweird.f32 %v778
    %vm785 = vweird.f32 %v779
    %vm786 = vmor %vm784, %vm785
    %v787 = vsel %vm786, %v779, %v783
    %v788 = vand.u32 2147483647, %v778
    %vm789 = vcmp.eq.f32.partialorder %v788, 8.507059e+37
    %v790 = vand.u32 %v778, 2147483648
    %v791 = vor.u32 1.1754944e-38, %v790
    %v792 = vsel %vm789, %v791, %v787
    %v793 = vmul.f32 1.0, %v792
    %v794 = vxor.u32 %v772, 2147483648
    %v795 = vmul.f32 %v794, 1.442695
    %v796 = vpow.pop %v795
    %v797 = vadd.f32 %v796, 1.0
    %v798 = vrcp.pop %v797
    %v799 = vmul.f32 %v797, %v798
    %v800 = vsub.f32 1.0, %v799
    %v801 = vmul.f32 %v798, %v800
    %v802 = vadd.f32 %v798, %v801
    %vm803 = vweird.f32 %v797
    %vm804 = vweird.f32 %v798
    %vm805 = vmor %vm803, %vm804
    %v806 = vsel %vm805, %v798, %v802
    %v807 = vand.u32 2147483647, %v797
    %vm808 = vcmp.eq.f32.partialorder %v807, 8.507059e+37
    %v809 = vand.u32 %v797, 2147483648
    %v810 = vor.u32 1.1754944e-38, %v809
    %v811 = vsel %vm808, %v810, %v806
    %v812 = vmul.f32 1.0, %v811
    %v813 = vtanh.pop %v773
    %v814 = vxor.u32 %v774, 2147483648
    %v815 = vmul.f32 %v814, 1.442695
    %v816 = vpow.pop %v815
    %v817 = vadd.f32 %v816, 1.0
    %v818 = vrcp.pop %v817
    %v819 = vmul.f32 %v817, %v818
    %v820 = vsub.f32 1.0, %v819
    %v821 = vmul.f32 %v818, %v820
    %v822 = vadd.f32 %v818, %v821
    %vm823 = vweird.f32 %v817
    %vm824 = vweird.f32 %v818
    %vm825 = vmor %vm823, %vm824
    %v826 = vsel %vm825, %v818, %v822
    %v827 = vand.u32 2147483647, %v817
    %vm828 = vcmp.eq.f32.partialorder %v827, 8.507059e+37
    %v829 = vand.u32 %v817, 2147483648
    %v830 = vor.u32 1.1754944e-38, %v829
    %v831 = vsel %vm828, %v830, %v826
    %v832 = vmul.f32 1.0, %v831
    %v833 = vmul.f32 %v812, 0.0
    %v834 = vmul.f32 %v793, %v813
    %v835 = vadd.f32 %v833, %v834
    %v836 = vtanh.pop %v835
    %v837 = vmul.f32 %v832, %v836
    %838 = vst [vmem:[#allocation3] sm:$0xff] %v837
    %s839 = scalar_lea.vmem [#allocation2], 32
    %v840 = vld [vmem:[%s839] sm:$0xff]
    %v841 = vld [vmem:[%s839 + $0x8] sm:$0xff]
    %v842 = vld [vmem:[%s839 + $0x10] sm:$0xff]
    %v843 = vld [vmem:[%s839 + $0x18] sm:$0xff]
    %v844 = vpack.c.bf16 %v837, %v837
    %845 = vmatpush.bf16.msra.mxu0 %v683
    %846 = vmatpush.bf16.msra.mxu0 %v679
    %847 = vmatpush.bf16.msra.mxu0 %v675
    %848 = vmatpush.bf16.msra.mxu0 %v671
    %849 = vmatpush.bf16.msra.mxu0 %v667
    %850 = vmatpush.bf16.msra.mxu0 %v663
    %851 = vmatpush.bf16.msra.mxu0 %v659
    %852 = vmatpush.bf16.msra.mxu0 %v655
    %853 = vmatmul.bf16.gmra.mxu0 %v844
    %v854 = vpop.f32.mrf.mxu0
    %v855 = vadd.f32 0.0, %v854
    %v856 = vpop.f32.mrf.mxu0
    %857 = vdwg.mxu0
    %858 = vmatpush.bf16.msra.mxu0 %v684
    %859 = vmatpush.bf16.msra.mxu0 %v680
    %860 = vmatpush.bf16.msra.mxu0 %v676
    %861 = vmatpush.bf16.msra.mxu0 %v672
    %862 = vmatpush.bf16.msra.mxu0 %v668
    %863 = vmatpush.bf16.msra.mxu0 %v664
    %864 = vmatpush.bf16.msra.mxu0 %v660
    %865 = vmatpush.bf16.msra.mxu0 %v656
    %866 = vmatmul.bf16.gmra.mxu0 %v844
    %v867 = vpop.f32.mrf.mxu0
    %v868 = vadd.f32 0.0, %v867
    %v869 = vpop.f32.mrf.mxu0
    %870 = vdwg.mxu0
    %871 = vmatpush.bf16.msra.mxu0 %v685
    %872 = vmatpush.bf16.msra.mxu0 %v681
    %873 = vmatpush.bf16.msra.mxu0 %v677
    %874 = vmatpush.bf16.msra.mxu0 %v673
    %875 = vmatpush.bf16.msra.mxu0 %v669
    %876 = vmatpush.bf16.msra.mxu0 %v665
    %877 = vmatpush.bf16.msra.mxu0 %v661
    %878 = vmatpush.bf16.msra.mxu0 %v657
    %879 = vmatmul.bf16.gmra.mxu0 %v844
    %v880 = vpop.f32.mrf.mxu0
    %v881 = vadd.f32 0.0, %v880
    %v882 = vpop.f32.mrf.mxu0
    %883 = vdwg.mxu0
    %884 = vmatpush.bf16.msra.mxu0 %v686
    %885 = vmatpush.bf16.msra.mxu0 %v682
    %886 = vmatpush.bf16.msra.mxu0 %v678
    %887 = vmatpush.bf16.msra.mxu0 %v674
    %888 = vmatpush.bf16.msra.mxu0 %v670
    %889 = vmatpush.bf16.msra.mxu0 %v666
    %890 = vmatpush.bf16.msra.mxu0 %v662
    %891 = vmatpush.bf16.msra.mxu0 %v658
    %892 = vmatmul.bf16.gmra.mxu0 %v844
    %v893 = vpop.f32.mrf.mxu0
    %v894 = vadd.f32 0.0, %v893
    %v895 = vpop.f32.mrf.mxu0
    %896 = vdwg.mxu0
    %v897 = vadd.f32 %v840, %v855
    %v898 = vadd.f32 %v841, %v868
    %v899 = vadd.f32 %v842, %v881
    %v900 = vadd.f32 %v843, %v894
    %v901 = vxor.u32 %v897, 2147483648
    %v902 = vmul.f32 %v901, 1.442695
    %v903 = vpow.pop %v902
    %v904 = vadd.f32 %v903, 1.0
    %v905 = vrcp.pop %v904
    %v906 = vmul.f32 %v904, %v905
    %v907 = vsub.f32 1.0, %v906
    %v908 = vmul.f32 %v905, %v907
    %v909 = vadd.f32 %v905, %v908
    %vm910 = vweird.f32 %v904
    %vm911 = vweird.f32 %v905
    %vm912 = vmor %vm910, %vm911
    %v913 = vsel %vm912, %v905, %v909
    %v914 = vand.u32 2147483647, %v904
    %vm915 = vcmp.eq.f32.partialorder %v914, 8.507059e+37
    %v916 = vand.u32 %v904, 2147483648
    %v917 = vor.u32 1.1754944e-38, %v916
    %v918 = vsel %vm915, %v917, %v913
    %v919 = vmul.f32 1.0, %v918
    %v920 = vxor.u32 %v898, 2147483648
    %v921 = vmul.f32 %v920, 1.442695
    %v922 = vpow.pop %v921
    %v923 = vadd.f32 %v922, 1.0
    %v924 = vrcp.pop %v923
    %v925 = vmul.f32 %v923, %v924
    %v926 = vsub.f32 1.0, %v925
    %v927 = vmul.f32 %v924, %v926
    %v928 = vadd.f32 %v924, %v927
    %vm929 = vweird.f32 %v923
    %vm930 = vweird.f32 %v924
    %vm931 = vmor %vm929, %vm930
    %v932 = vsel %vm931, %v924, %v928
    %v933 = vand.u32 2147483647, %v923
    %vm934 = vcmp.eq.f32.partialorder %v933, 8.507059e+37
    %v935 = vand.u32 %v923, 2147483648
    %v936 = vor.u32 1.1754944e-38, %v935
    %v937 = vsel %vm934, %v936, %v932
    %v938 = vmul.f32 1.0, %v937
    %v939 = vtanh.pop %v899
    %v940 = vxor.u32 %v900, 2147483648
    %v941 = vmul.f32 %v940, 1.442695
    %v942 = vpow.pop %v941
    %v943 = vadd.f32 %v942, 1.0
    %v944 = vrcp.pop %v943
    %v945 = vmul.f32 %v943, %v944
    %v946 = vsub.f32 1.0, %v945
    %v947 = vmul.f32 %v944, %v946
    %v948 = vadd.f32 %v944, %v947
    %vm949 = vweird.f32 %v943
    %vm950 = vweird.f32 %v944
    %vm951 = vmor %vm949, %vm950
    %v952 = vsel %vm951, %v944, %v948
    %v953 = vand.u32 2147483647, %v943
    %vm954 = vcmp.eq.f32.partialorder %v953, 8.507059e+37
    %v955 = vand.u32 %v943, 2147483648
    %v956 = vor.u32 1.1754944e-38, %v955
    %v957 = vsel %vm954, %v956, %v952
    %v958 = vmul.f32 1.0, %v957
    %v959 = vmul.f32 %v938, %v835
    %v960 = vmul.f32 %v919, %v939
    %v961 = vadd.f32 %v959, %v960
    %v962 = vtanh.pop %v961
    %v963 = vmul.f32 %v958, %v962
    %s964 = scalar_lea.vmem [#allocation3], 8
    %965 = vst [vmem:[%s964] sm:$0xff] %v963
    %s966 = scalar_lea.vmem [#allocation2], 64
    %v967 = vld [vmem:[%s966] sm:$0xff]
    %v968 = vld [vmem:[%s966 + $0x8] sm:$0xff]
    %v969 = vld [vmem:[%s966 + $0x10] sm:$0xff]
    %v970 = vld [vmem:[%s966 + $0x18] sm:$0xff]
    %v971 = vpack.c.bf16 %v963, %v963
    %972 = vmatpush.bf16.msra.mxu0 %v683
    %973 = vmatpush.bf16.msra.mxu0 %v679
    %974 = vmatpush.bf16.msra.mxu0 %v675
    %975 = vmatpush.bf16.msra.mxu0 %v671
    %976 = vmatpush.bf16.msra.mxu0 %v667
    %977 = vmatpush.bf16.msra.mxu0 %v663
    %978 = vmatpush.bf16.msra.mxu0 %v659
    %979 = vmatpush.bf16.msra.mxu0 %v655
    %980 = vmatmul.bf16.gmra.mxu0 %v971
    %v981 = vpop.f32.mrf.mxu0
    %v982 = vadd.f32 0.0, %v981
    %v983 = vpop.f32.mrf.mxu0
    %984 = vdwg.mxu0
    %985 = vmatpush.bf16.msra.mxu0 %v684
    %986 = vmatpush.bf16.msra.mxu0 %v680
    %987 = vmatpush.bf16.msra.mxu0 %v676
    %988 = vmatpush.bf16.msra.mxu0 %v672
    %989 = vmatpush.bf16.msra.mxu0 %v668
    %990 = vmatpush.bf16.msra.mxu0 %v664
    %991 = vmatpush.bf16.msra.mxu0 %v660
    %992 = vmatpush.bf16.msra.mxu0 %v656
    %993 = vmatmul.bf16.gmra.mxu0 %v971
    %v994 = vpop.f32.mrf.mxu0
    %v995 = vadd.f32 0.0, %v994
    %v996 = vpop.f32.mrf.mxu0
    %997 = vdwg.mxu0
    %998 = vmatpush.bf16.msra.mxu0 %v685
    %999 = vmatpush.bf16.msra.mxu0 %v681
    %1000 = vmatpush.bf16.msra.mxu0 %v677
    %1001 = vmatpush.bf16.msra.mxu0 %v673
    %1002 = vmatpush.bf16.msra.mxu0 %v669
    %1003 = vmatpush.bf16.msra.mxu0 %v665
    %1004 = vmatpush.bf16.msra.mxu0 %v661
    %1005 = vmatpush.bf16.msra.mxu0 %v657
    %1006 = vmatmul.bf16.gmra.mxu0 %v971
    %v1007 = vpop.f32.mrf.mxu0
    %v1008 = vadd.f32 0.0, %v1007
    %v1009 = vpop.f32.mrf.mxu0
    %1010 = vdwg.mxu0
    %1011 = vmatpush.bf16.msra.mxu0 %v686
    %1012 = vmatpush.bf16.msra.mxu0 %v682
    %1013 = vmatpush.bf16.msra.mxu0 %v678
    %1014 = vmatpush.bf16.msra.mxu0 %v674
    %1015 = vmatpush.bf16.msra.mxu0 %v670
    %1016 = vmatpush.bf16.msra.mxu0 %v666
    %1017 = vmatpush.bf16.msra.mxu0 %v662
    %1018 = vmatpush.bf16.msra.mxu0 %v658
    %1019 = vmatmul.bf16.gmra.mxu0 %v971
    %v1020 = vpop.f32.mrf.mxu0
    %v1021 = vadd.f32 0.0, %v1020
    %v1022 = vpop.f32.mrf.mxu0
    %1023 = vdwg.mxu0
    %v1024 = vadd.f32 %v967, %v982
    %v1025 = vadd.f32 %v968, %v995
    %v1026 = vadd.f32 %v969, %v1008
    %v1027 = vadd.f32 %v970, %v1021
    %v1028 = vxor.u32 %v1024, 2147483648
    %v1029 = vmul.f32 %v1028, 1.442695
    %v1030 = vpow.pop %v1029
    %v1031 = vadd.f32 %v1030, 1.0
    %v1032 = vrcp.pop %v1031
    %v1033 = vmul.f32 %v1031, %v1032
    %v1034 = vsub.f32 1.0, %v1033
    %v1035 = vmul.f32 %v1032, %v1034
    %v1036 = vadd.f32 %v1032, %v1035
    %vm1037 = vweird.f32 %v1031
    %vm1038 = vweird.f32 %v1032
    %vm1039 = vmor %vm1037, %vm1038
    %v1040 = vsel %vm1039, %v1032, %v1036
    %v1041 = vand.u32 2147483647, %v1031
    %vm1042 = vcmp.eq.f32.partialorder %v1041, 8.507059e+37
    %v1043 = vand.u32 %v1031, 2147483648
    %v1044 = vor.u32 1.1754944e-38, %v1043
    %v1045 = vsel %vm1042, %v1044, %v1040
    %v1046 = vmul.f32 1.0, %v1045
    %v1047 = vxor.u32 %v1025, 2147483648
    %v1048 = vmul.f32 %v1047, 1.442695
    %v1049 = vpow.pop %v1048
    %v1050 = vadd.f32 %v1049, 1.0
    %v1051 = vrcp.pop %v1050
    %v1052 = vmul.f32 %v1050, %v1051
    %v1053 = vsub.f32 1.0, %v1052
    %v1054 = vmul.f32 %v1051, %v1053
    %v1055 = vadd.f32 %v1051, %v1054
    %vm1056 = vweird.f32 %v1050
    %vm1057 = vweird.f32 %v1051
    %vm1058 = vmor %vm1056, %vm1057
    %v1059 = vsel %vm1058, %v1051, %v1055
    %v1060 = vand.u32 2147483647, %v1050
    %vm1061 = vcmp.eq.f32.partialorder %v1060, 8.507059e+37
    %v1062 = vand.u32 %v1050, 2147483648
    %v1063 = vor.u32 1.1754944e-38, %v1062
    %v1064 = vsel %vm1061, %v1063, %v1059
    %v1065 = vmul.f32 1.0, %v1064
    %v1066 = vtanh.pop %v1026
    %v1067 = vxor.u32 %v1027, 2147483648
    %v1068 = vmul.f32 %v1067, 1.442695
    %v1069 = vpow.pop %v1068
    %v1070 = vadd.f32 %v1069, 1.0
    %v1071 = vrcp.pop %v1070
    %v1072 = vmul.f32 %v1070, %v1071
    %v1073 = vsub.f32 1.0, %v1072
    %v1074 = vmul.f32 %v1071, %v1073
    %v1075 = vadd.f32 %v1071, %v1074
    %vm1076 = vweird.f32 %v1070
    %vm1077 = vweird.f32 %v1071
    %vm1078 = vmor %vm1076, %vm1077
    %v1079 = vsel %vm1078, %v1071, %v1075
    %v1080 = vand.u32 2147483647, %v1070
    %vm1081 = vcmp.eq.f32.partialorder %v1080, 8.507059e+37
    %v1082 = vand.u32 %v1070, 2147483648
    %v1083 = vor.u32 1.1754944e-38, %v1082
    %v1084 = vsel %vm1081, %v1083, %v1079
    %v1085 = vmul.f32 1.0, %v1084
    %v1086 = vmul.f32 %v1065, %v961
    %v1087 = vmul.f32 %v1046, %v1066
    %v1088 = vadd.f32 %v1086, %v1087
    %v1089 = vtanh.pop %v1088
    %v1090 = vmul.f32 %v1085, %v1089
    %s1091 = scalar_lea.vmem [#allocation3], 16
    %1092 = vst [vmem:[%s1091] sm:$0xff] %v1090
    %s1093 = scalar_lea.vmem [#allocation2], 96
    %v1094 = vld [vmem:[%s1093] sm:$0xff]
    %v1095 = vld [vmem:[%s1093 + $0x8] sm:$0xff]
    %v1096 = vld [vmem:[%s1093 + $0x10] sm:$0xff]
    %v1097 = vld [vmem:[%s1093 + $0x18] sm:$0xff]
    %v1098 = vpack.c.bf16 %v1090, %v1090
    %1099 = vmatpush.bf16.msra.mxu0 %v683
    %1100 = vmatpush.bf16.msra.mxu0 %v679
    %1101 = vmatpush.bf16.msra.mxu0 %v675
    %1102 = vmatpush.bf16.msra.mxu0 %v671
    %1103 = vmatpush.bf16.msra.mxu0 %v667
    %1104 = vmatpush.bf16.msra.mxu0 %v663
    %1105 = vmatpush.bf16.msra.mxu0 %v659
    %1106 = vmatpush.bf16.msra.mxu0 %v655
    %1107 = vmatmul.bf16.gmra.mxu0 %v1098
    %v1108 = vpop.f32.mrf.mxu0
    %v1109 = vadd.f32 0.0, %v1108
    %v1110 = vpop.f32.mrf.mxu0
    %1111 = vdwg.mxu0
    %1112 = vmatpush.bf16.msra.mxu0 %v684
    %1113 = vmatpush.bf16.msra.mxu0 %v680
    %1114 = vmatpush.bf16.msra.mxu0 %v676
    %1115 = vmatpush.bf16.msra.mxu0 %v672
    %1116 = vmatpush.bf16.msra.mxu0 %v668
    %1117 = vmatpush.bf16.msra.mxu0 %v664
    %1118 = vmatpush.bf16.msra.mxu0 %v660
    %1119 = vmatpush.bf16.msra.mxu0 %v656
    %1120 = vmatmul.bf16.gmra.mxu0 %v1098
    %v1121 = vpop.f32.mrf.mxu0
    %v1122 = vadd.f32 0.0, %v1121
    %v1123 = vpop.f32.mrf.mxu0
    %1124 = vdwg.mxu0
    %1125 = vmatpush.bf16.msra.mxu0 %v685
    %1126 = vmatpush.bf16.msra.mxu0 %v681
    %1127 = vmatpush.bf16.msra.mxu0 %v677
    %1128 = vmatpush.bf16.msra.mxu0 %v673
    %1129 = vmatpush.bf16.msra.mxu0 %v669
    %1130 = vmatpush.bf16.msra.mxu0 %v665
    %1131 = vmatpush.bf16.msra.mxu0 %v661
    %1132 = vmatpush.bf16.msra.mxu0 %v657
    %1133 = vmatmul.bf16.gmra.mxu0 %v1098
    %v1134 = vpop.f32.mrf.mxu0
    %v1135 = vadd.f32 0.0, %v1134
    %v1136 = vpop.f32.mrf.mxu0
    %1137 = vdwg.mxu0
    %1138 = vmatpush.bf16.msra.mxu0 %v686
    %1139 = vmatpush.bf16.msra.mxu0 %v682
    %1140 = vmatpush.bf16.msra.mxu0 %v678
    %1141 = vmatpush.bf16.msra.mxu0 %v674
    %1142 = vmatpush.bf16.msra.mxu0 %v670
    %1143 = vmatpush.bf16.msra.mxu0 %v666
    %1144 = vmatpush.bf16.msra.mxu0 %v662
    %1145 = vmatpush.bf16.msra.mxu0 %v658
    %1146 = vmatmul.bf16.gmra.mxu0 %v1098
    %v1147 = vpop.f32.mrf.mxu0
    %v1148 = vadd.f32 0.0, %v1147
    %v1149 = vpop.f32.mrf.mxu0
    %1150 = vdwg.mxu0
    %v1151 = vadd.f32 %v1094, %v1109
    %v1152 = vadd.f32 %v1095, %v1122
    %v1153 = vadd.f32 %v1096, %v1135
    %v1154 = vadd.f32 %v1097, %v1148
    %v1155 = vxor.u32 %v1151, 2147483648
    %v1156 = vmul.f32 %v1155, 1.442695
    %v1157 = vpow.pop %v1156
    %v1158 = vadd.f32 %v1157, 1.0
    %v1159 = vrcp.pop %v1158
    %v1160 = vmul.f32 %v1158, %v1159
    %v1161 = vsub.f32 1.0, %v1160
    %v1162 = vmul.f32 %v1159, %v1161
    %v1163 = vadd.f32 %v1159, %v1162
    %vm1164 = vweird.f32 %v1158
    %vm1165 = vweird.f32 %v1159
    %vm1166 = vmor %vm1164, %vm1165
    %v1167 = vsel %vm1166, %v1159, %v1163
    %v1168 = vand.u32 2147483647, %v1158
    %vm1169 = vcmp.eq.f32.partialorder %v1168, 8.507059e+37
    %v1170 = vand.u32 %v1158, 2147483648
    %v1171 = vor.u32 1.1754944e-38, %v1170
    %v1172 = vsel %vm1169, %v1171, %v1167
    %v1173 = vmul.f32 1.0, %v1172
    %v1174 = vxor.u32 %v1152, 2147483648
    %v1175 = vmul.f32 %v1174, 1.442695
    %v1176 = vpow.pop %v1175
    %v1177 = vadd.f32 %v1176, 1.0
    %v1178 = vrcp.pop %v1177
    %v1179 = vmul.f32 %v1177, %v1178
    %v1180 = vsub.f32 1.0, %v1179
    %v1181 = vmul.f32 %v1178, %v1180
    %v1182 = vadd.f32 %v1178, %v1181
    %vm1183 = vweird.f32 %v1177
    %vm1184 = vweird.f32 %v1178
    %vm1185 = vmor %vm1183, %vm1184
    %v1186 = vsel %vm1185, %v1178, %v1182
    %v1187 = vand.u32 2147483647, %v1177
    %vm1188 = vcmp.eq.f32.partialorder %v1187, 8.507059e+37
    %v1189 = vand.u32 %v1177, 2147483648
    %v1190 = vor.u32 1.1754944e-38, %v1189
    %v1191 = vsel %vm1188, %v1190, %v1186
    %v1192 = vmul.f32 1.0, %v1191
    %v1193 = vtanh.pop %v1153
    %v1194 = vxor.u32 %v1154, 2147483648
    %v1195 = vmul.f32 %v1194, 1.442695
    %v1196 = vpow.pop %v1195
    %v1197 = vadd.f32 %v1196, 1.0
    %v1198 = vrcp.pop %v1197
    %v1199 = vmul.f32 %v1197, %v1198
    %v1200 = vsub.f32 1.0, %v1199
    %v1201 = vmul.f32 %v1198, %v1200
    %v1202 = vadd.f32 %v1198, %v1201
    %vm1203 = vweird.f32 %v1197
    %vm1204 = vweird.f32 %v1198
    %vm1205 = vmor %vm1203, %vm1204
    %v1206 = vsel %vm1205, %v1198, %v1202
    %v1207 = vand.u32 2147483647, %v1197
    %vm1208 = vcmp.eq.f32.partialorder %v1207, 8.507059e+37
    %v1209 = vand.u32 %v1197, 2147483648
    %v1210 = vor.u32 1.1754944e-38, %v1209
    %v1211 = vsel %vm1208, %v1210, %v1206
    %v1212 = vmul.f32 1.0, %v1211
    %v1213 = vmul.f32 %v1192, %v1088
    %v1214 = vmul.f32 %v1173, %v1193
    %v1215 = vadd.f32 %v1213, %v1214
    %v1216 = vtanh.pop %v1215
    %v1217 = vmul.f32 %v1212, %v1216
    %s1218 = scalar_lea.vmem [#allocation3], 24
    %1219 = vst [vmem:[%s1218] sm:$0xff] %v1217
    %s1220 = scalar_lea.vmem [#allocation2], 128
    %v1221 = vld [vmem:[%s1220] sm:$0xff]
    %v1222 = vld [vmem:[%s1220 + $0x8] sm:$0xff]
    %v1223 = vld [vmem:[%s1220 + $0x10] sm:$0xff]
    %v1224 = vld [vmem:[%s1220 + $0x18] sm:$0xff]
    %v1225 = vpack.c.bf16 %v1217, %v1217
    %1226 = vmatpush.bf16.msra.mxu0 %v683
    %1227 = vmatpush.bf16.msra.mxu0 %v679
    %1228 = vmatpush.bf16.msra.mxu0 %v675
    %1229 = vmatpush.bf16.msra.mxu0 %v671
    %1230 = vmatpush.bf16.msra.mxu0 %v667
    %1231 = vmatpush.bf16.msra.mxu0 %v663
    %1232 = vmatpush.bf16.msra.mxu0 %v659
    %1233 = vmatpush.bf16.msra.mxu0 %v655
    %1234 = vmatmul.bf16.gmra.mxu0 %v1225
    %v1235 = vpop.f32.mrf.mxu0
    %v1236 = vadd.f32 0.0, %v1235
    %v1237 = vpop.f32.mrf.mxu0
    %1238 = vdwg.mxu0
    %1239 = vmatpush.bf16.msra.mxu0 %v684
    %1240 = vmatpush.bf16.msra.mxu0 %v680
    %1241 = vmatpush.bf16.msra.mxu0 %v676
    %1242 = vmatpush.bf16.msra.mxu0 %v672
    %1243 = vmatpush.bf16.msra.mxu0 %v668
    %1244 = vmatpush.bf16.msra.mxu0 %v664
    %1245 = vmatpush.bf16.msra.mxu0 %v660
    %1246 = vmatpush.bf16.msra.mxu0 %v656
    %1247 = vmatmul.bf16.gmra.mxu0 %v1225
    %v1248 = vpop.f32.mrf.mxu0
    %v1249 = vadd.f32 0.0, %v1248
    %v1250 = vpop.f32.mrf.mxu0
    %1251 = vdwg.mxu0
    %1252 = vmatpush.bf16.msra.mxu0 %v685
    %1253 = vmatpush.bf16.msra.mxu0 %v681
    %1254 = vmatpush.bf16.msra.mxu0 %v677
    %1255 = vmatpush.bf16.msra.mxu0 %v673
    %1256 = vmatpush.bf16.msra.mxu0 %v669
    %1257 = vmatpush.bf16.msra.mxu0 %v665
    %1258 = vmatpush.bf16.msra.mxu0 %v661
    %1259 = vmatpush.bf16.msra.mxu0 %v657
    %1260 = vmatmul.bf16.gmra.mxu0 %v1225
    %v1261 = vpop.f32.mrf.mxu0
    %v1262 = vadd.f32 0.0, %v1261
    %v1263 = vpop.f32.mrf.mxu0
    %1264 = vdwg.mxu0
    %1265 = vmatpush.bf16.msra.mxu0 %v686
    %1266 = vmatpush.bf16.msra.mxu0 %v682
    %1267 = vmatpush.bf16.msra.mxu0 %v678
    %1268 = vmatpush.bf16.msra.mxu0 %v674
    %1269 = vmatpush.bf16.msra.mxu0 %v670
    %1270 = vmatpush.bf16.msra.mxu0 %v666
    %1271 = vmatpush.bf16.msra.mxu0 %v662
    %1272 = vmatpush.bf16.msra.mxu0 %v658
    %1273 = vmatmul.bf16.gmra.mxu0 %v1225
    %v1274 = vpop.f32.mrf.mxu0
    %v1275 = vadd.f32 0.0, %v1274
    %v1276 = vpop.f32.mrf.mxu0
    %1277 = vdwg.mxu0
    %v1278 = vadd.f32 %v1221, %v1236
    %v1279 = vadd.f32 %v1222, %v1249
    %v1280 = vadd.f32 %v1223, %v1262
    %v1281 = vadd.f32 %v1224, %v1275
    %v1282 = vxor.u32 %v1278, 2147483648
    %v1283 = vmul.f32 %v1282, 1.442695
    %v1284 = vpow.pop %v1283
    %v1285 = vadd.f32 %v1284, 1.0
    %v1286 = vrcp.pop %v1285
    %v1287 = vmul.f32 %v1285, %v1286
    %v1288 = vsub.f32 1.0, %v1287
    %v1289 = vmul.f32 %v1286, %v1288
    %v1290 = vadd.f32 %v1286, %v1289
    %vm1291 = vweird.f32 %v1285
    %vm1292 = vweird.f32 %v1286
    %vm1293 = vmor %vm1291, %vm1292
    %v1294 = vsel %vm1293, %v1286, %v1290
    %v1295 = vand.u32 2147483647, %v1285
    %vm1296 = vcmp.eq.f32.partialorder %v1295, 8.507059e+37
    %v1297 = vand.u32 %v1285, 2147483648
    %v1298 = vor.u32 1.1754944e-38, %v1297
    %v1299 = vsel %vm1296, %v1298, %v1294
    %v1300 = vmul.f32 1.0, %v1299
    %v1301 = vxor.u32 %v1279, 2147483648
    %v1302 = vmul.f32 %v1301, 1.442695
    %v1303 = vpow.pop %v1302
    %v1304 = vadd.f32 %v1303, 1.0
    %v1305 = vrcp.pop %v1304
    %v1306 = vmul.f32 %v1304, %v1305
    %v1307 = vsub.f32 1.0, %v1306
    %v1308 = vmul.f32 %v1305, %v1307
    %v1309 = vadd.f32 %v1305, %v1308
    %vm1310 = vweird.f32 %v1304
    %vm1311 = vweird.f32 %v1305
    %vm1312 = vmor %vm1310, %vm1311
    %v1313 = vsel %vm1312, %v1305, %v1309
    %v1314 = vand.u32 2147483647, %v1304
    %vm1315 = vcmp.eq.f32.partialorder %v1314, 8.507059e+37
    %v1316 = vand.u32 %v1304, 2147483648
    %v1317 = vor.u32 1.1754944e-38, %v1316
    %v1318 = vsel %vm1315, %v1317, %v1313
    %v1319 = vmul.f32 1.0, %v1318
    %v1320 = vtanh.pop %v1280
    %v1321 = vxor.u32 %v1281, 2147483648
    %v1322 = vmul.f32 %v1321, 1.442695
    %v1323 = vpow.pop %v1322
    %v1324 = vadd.f32 %v1323, 1.0
    %v1325 = vrcp.pop %v1324
    %v1326 = vmul.f32 %v1324, %v1325
    %v1327 = vsub.f32 1.0, %v1326
    %v1328 = vmul.f32 %v1325, %v1327
    %v1329 = vadd.f32 %v1325, %v1328
    %vm1330 = vweird.f32 %v1324
    %vm1331 = vweird.f32 %v1325
    %vm1332 = vmor %vm1330, %vm1331
    %v1333 = vsel %vm1332, %v1325, %v1329
    %v1334 = vand.u32 2147483647, %v1324
    %vm1335 = vcmp.eq.f32.partialorder %v1334, 8.507059e+37
    %v1336 = vand.u32 %v1324, 2147483648
    %v1337 = vor.u32 1.1754944e-38, %v1336
    %v1338 = vsel %vm1335, %v1337, %v1333
    %v1339 = vmul.f32 1.0, %v1338
    %v1340 = vmul.f32 %v1319, %v1215
    %v1341 = vmul.f32 %v1300, %v1320
    %v1342 = vadd.f32 %v1340, %v1341
    %v1343 = vtanh.pop %v1342
    %v1344 = vmul.f32 %v1339, %v1343
    %s1345 = scalar_lea.vmem [#allocation3], 32
    %1346 = vst [vmem:[%s1345] sm:$0xff] %v1344
    %s1347 = scalar_lea.vmem [#allocation2], 160
    %v1348 = vld [vmem:[%s1347] sm:$0xff]
    %v1349 = vld [vmem:[%s1347 + $0x8] sm:$0xff]
    %v1350 = vld [vmem:[%s1347 + $0x10] sm:$0xff]
    %v1351 = vld [vmem:[%s1347 + $0x18] sm:$0xff]
    %v1352 = vpack.c.bf16 %v1344, %v1344
    %1353 = vmatpush.bf16.msra.mxu0 %v683
    %1354 = vmatpush.bf16.msra.mxu0 %v679
    %1355 = vmatpush.bf16.msra.mxu0 %v675
    %1356 = vmatpush.bf16.msra.mxu0 %v671
    %1357 = vmatpush.bf16.msra.mxu0 %v667
    %1358 = vmatpush.bf16.msra.mxu0 %v663
    %1359 = vmatpush.bf16.msra.mxu0 %v659
    %1360 = vmatpush.bf16.msra.mxu0 %v655
    %1361 = vmatmul.bf16.gmra.mxu0 %v1352
    %v1362 = vpop.f32.mrf.mxu0
    %v1363 = vadd.f32 0.0, %v1362
    %v1364 = vpop.f32.mrf.mxu0
    %1365 = vdwg.mxu0
    %1366 = vmatpush.bf16.msra.mxu0 %v684
    %1367 = vmatpush.bf16.msra.mxu0 %v680
    %1368 = vmatpush.bf16.msra.mxu0 %v676
    %1369 = vmatpush.bf16.msra.mxu0 %v672
    %1370 = vmatpush.bf16.msra.mxu0 %v668
    %1371 = vmatpush.bf16.msra.mxu0 %v664
    %1372 = vmatpush.bf16.msra.mxu0 %v660
    %1373 = vmatpush.bf16.msra.mxu0 %v656
    %1374 = vmatmul.bf16.gmra.mxu0 %v1352
    %v1375 = vpop.f32.mrf.mxu0
    %v1376 = vadd.f32 0.0, %v1375
    %v1377 = vpop.f32.mrf.mxu0
    %1378 = vdwg.mxu0
    %1379 = vmatpush.bf16.msra.mxu0 %v685
    %1380 = vmatpush.bf16.msra.mxu0 %v681
    %1381 = vmatpush.bf16.msra.mxu0 %v677
    %1382 = vmatpush.bf16.msra.mxu0 %v673
    %1383 = vmatpush.bf16.msra.mxu0 %v669
    %1384 = vmatpush.bf16.msra.mxu0 %v665
    %1385 = vmatpush.bf16.msra.mxu0 %v661
    %1386 = vmatpush.bf16.msra.mxu0 %v657
    %1387 = vmatmul.bf16.gmra.mxu0 %v1352
    %v1388 = vpop.f32.mrf.mxu0
    %v1389 = vadd.f32 0.0, %v1388
    %v1390 = vpop.f32.mrf.mxu0
    %1391 = vdwg.mxu0
    %1392 = vmatpush.bf16.msra.mxu0 %v686
    %1393 = vmatpush.bf16.msra.mxu0 %v682
    %1394 = vmatpush.bf16.msra.mxu0 %v678
    %1395 = vmatpush.bf16.msra.mxu0 %v674
    %1396 = vmatpush.bf16.msra.mxu0 %v670
    %1397 = vmatpush.bf16.msra.mxu0 %v666
    %1398 = vmatpush.bf16.msra.mxu0 %v662
    %1399 = vmatpush.bf16.msra.mxu0 %v658
    %1400 = vmatmul.bf16.gmra.mxu0 %v1352
    %v1401 = vpop.f32.mrf.mxu0
    %v1402 = vadd.f32 0.0, %v1401
    %v1403 = vpop.f32.mrf.mxu0
    %1404 = vdwg.mxu0
    %v1405 = vadd.f32 %v1348, %v1363
    %v1406 = vadd.f32 %v1349, %v1376
    %v1407 = vadd.f32 %v1350, %v1389
    %v1408 = vadd.f32 %v1351, %v1402
    %v1409 = vxor.u32 %v1405, 2147483648
    %v1410 = vmul.f32 %v1409, 1.442695
    %v1411 = vpow.pop %v1410
    %v1412 = vadd.f32 %v1411, 1.0
    %v1413 = vrcp.pop %v1412
    %v1414 = vmul.f32 %v1412, %v1413
    %v1415 = vsub.f32 1.0, %v1414
    %v1416 = vmul.f32 %v1413, %v1415
    %v1417 = vadd.f32 %v1413, %v1416
    %vm1418 = vweird.f32 %v1412
    %vm1419 = vweird.f32 %v1413
    %vm1420 = vmor %vm1418, %vm1419
    %v1421 = vsel %vm1420, %v1413, %v1417
    %v1422 = vand.u32 2147483647, %v1412
    %vm1423 = vcmp.eq.f32.partialorder %v1422, 8.507059e+37
    %v1424 = vand.u32 %v1412, 2147483648
    %v1425 = vor.u32 1.1754944e-38, %v1424
    %v1426 = vsel %vm1423, %v1425, %v1421
    %v1427 = vmul.f32 1.0, %v1426
    %v1428 = vxor.u32 %v1406, 2147483648
    %v1429 = vmul.f32 %v1428, 1.442695
    %v1430 = vpow.pop %v1429
    %v1431 = vadd.f32 %v1430, 1.0
    %v1432 = vrcp.pop %v1431
    %v1433 = vmul.f32 %v1431, %v1432
    %v1434 = vsub.f32 1.0, %v1433
    %v1435 = vmul.f32 %v1432, %v1434
    %v1436 = vadd.f32 %v1432, %v1435
    %vm1437 = vweird.f32 %v1431
    %vm1438 = vweird.f32 %v1432
    %vm1439 = vmor %vm1437, %vm1438
    %v1440 = vsel %vm1439, %v1432, %v1436
    %v1441 = vand.u32 2147483647, %v1431
    %vm1442 = vcmp.eq.f32.partialorder %v1441, 8.507059e+37
    %v1443 = vand.u32 %v1431, 2147483648
    %v1444 = vor.u32 1.1754944e-38, %v1443
    %v1445 = vsel %vm1442, %v1444, %v1440
    %v1446 = vmul.f32 1.0, %v1445
    %v1447 = vtanh.pop %v1407
    %v1448 = vxor.u32 %v1408, 2147483648
    %v1449 = vmul.f32 %v1448, 1.442695
    %v1450 = vpow.pop %v1449
    %v1451 = vadd.f32 %v1450, 1.0
    %v1452 = vrcp.pop %v1451
    %v1453 = vmul.f32 %v1451, %v1452
    %v1454 = vsub.f32 1.0, %v1453
    %v1455 = vmul.f32 %v1452, %v1454
    %v1456 = vadd.f32 %v1452, %v1455
    %vm1457 = vweird.f32 %v1451
    %vm1458 = vweird.f32 %v1452
    %vm1459 = vmor %vm1457, %vm1458
    %v1460 = vsel %vm1459, %v1452, %v1456
    %v1461 = vand.u32 2147483647, %v1451
    %vm1462 = vcmp.eq.f32.partialorder %v1461, 8.507059e+37
    %v1463 = vand.u32 %v1451, 2147483648
    %v1464 = vor.u32 1.1754944e-38, %v1463
    %v1465 = vsel %vm1462, %v1464, %v1460
    %v1466 = vmul.f32 1.0, %v1465
    %v1467 = vmul.f32 %v1446, %v1342
    %v1468 = vmul.f32 %v1427, %v1447
    %v1469 = vadd.f32 %v1467, %v1468
    %v1470 = vtanh.pop %v1469
    %v1471 = vmul.f32 %v1466, %v1470
    %s1472 = scalar_lea.vmem [#allocation3], 40
    %1473 = vst [vmem:[%s1472] sm:$0xff] %v1471
    %s1474 = scalar_lea.vmem [#allocation2], 192
    %v1475 = vld [vmem:[%s1474] sm:$0xff]
    %v1476 = vld [vmem:[%s1474 + $0x8] sm:$0xff]
    %v1477 = vld [vmem:[%s1474 + $0x10] sm:$0xff]
    %v1478 = vld [vmem:[%s1474 + $0x18] sm:$0xff]
    %v1479 = vpack.c.bf16 %v1471, %v1471
    %1480 = vmatpush.bf16.msra.mxu0 %v683
    %1481 = vmatpush.bf16.msra.mxu0 %v679
    %1482 = vmatpush.bf16.msra.mxu0 %v675
    %1483 = vmatpush.bf16.msra.mxu0 %v671
    %1484 = vmatpush.bf16.msra.mxu0 %v667
    %1485 = vmatpush.bf16.msra.mxu0 %v663
    %1486 = vmatpush.bf16.msra.mxu0 %v659
    %1487 = vmatpush.bf16.msra.mxu0 %v655
    %1488 = vmatmul.bf16.gmra.mxu0 %v1479
    %v1489 = vpop.f32.mrf.mxu0
    %v1490 = vadd.f32 0.0, %v1489
    %v1491 = vpop.f32.mrf.mxu0
    %1492 = vdwg.mxu0
    %1493 = vmatpush.bf16.msra.mxu0 %v684
    %1494 = vmatpush.bf16.msra.mxu0 %v680
    %1495 = vmatpush.bf16.msra.mxu0 %v676
    %1496 = vmatpush.bf16.msra.mxu0 %v672
    %1497 = vmatpush.bf16.msra.mxu0 %v668
    %1498 = vmatpush.bf16.msra.mxu0 %v664
    %1499 = vmatpush.bf16.msra.mxu0 %v660
    %1500 = vmatpush.bf16.msra.mxu0 %v656
    %1501 = vmatmul.bf16.gmra.mxu0 %v1479
    %v1502 = vpop.f32.mrf.mxu0
    %v1503 = vadd.f32 0.0, %v1502
    %v1504 = vpop.f32.mrf.mxu0
    %1505 = vdwg.mxu0
    %1506 = vmatpush.bf16.msra.mxu0 %v685
    %1507 = vmatpush.bf16.msra.mxu0 %v681
    %1508 = vmatpush.bf16.msra.mxu0 %v677
    %1509 = vmatpush.bf16.msra.mxu0 %v673
    %1510 = vmatpush.bf16.msra.mxu0 %v669
    %1511 = vmatpush.bf16.msra.mxu0 %v665
    %1512 = vmatpush.bf16.msra.mxu0 %v661
    %1513 = vmatpush.bf16.msra.mxu0 %v657
    %1514 = vmatmul.bf16.gmra.mxu0 %v1479
    %v1515 = vpop.f32.mrf.mxu0
    %v1516 = vadd.f32 0.0, %v1515
    %v1517 = vpop.f32.mrf.mxu0
    %1518 = vdwg.mxu0
    %1519 = vmatpush.bf16.msra.mxu0 %v686
    %1520 = vmatpush.bf16.msra.mxu0 %v682
    %1521 = vmatpush.bf16.msra.mxu0 %v678
    %1522 = vmatpush.bf16.msra.mxu0 %v674
    %1523 = vmatpush.bf16.msra.mxu0 %v670
    %1524 = vmatpush.bf16.msra.mxu0 %v666
    %1525 = vmatpush.bf16.msra.mxu0 %v662
    %1526 = vmatpush.bf16.msra.mxu0 %v658
    %1527 = vmatmul.bf16.gmra.mxu0 %v1479
    %v1528 = vpop.f32.mrf.mxu0
    %v1529 = vadd.f32 0.0, %v1528
    %v1530 = vpop.f32.mrf.mxu0
    %1531 = vdwg.mxu0
    %v1532 = vadd.f32 %v1475, %v1490
    %v1533 = vadd.f32 %v1476, %v1503
    %v1534 = vadd.f32 %v1477, %v1516
    %v1535 = vadd.f32 %v1478, %v1529
    %v1536 = vxor.u32 %v1532, 2147483648
    %v1537 = vmul.f32 %v1536, 1.442695
    %v1538 = vpow.pop %v1537
    %v1539 = vadd.f32 %v1538, 1.0
    %v1540 = vrcp.pop %v1539
    %v1541 = vmul.f32 %v1539, %v1540
    %v1542 = vsub.f32 1.0, %v1541
    %v1543 = vmul.f32 %v1540, %v1542
    %v1544 = vadd.f32 %v1540, %v1543
    %vm1545 = vweird.f32 %v1539
    %vm1546 = vweird.f32 %v1540
    %vm1547 = vmor %vm1545, %vm1546
    %v1548 = vsel %vm1547, %v1540, %v1544
    %v1549 = vand.u32 2147483647, %v1539
    %vm1550 = vcmp.eq.f32.partialorder %v1549, 8.507059e+37
    %v1551 = vand.u32 %v1539, 2147483648
    %v1552 = vor.u32 1.1754944e-38, %v1551
    %v1553 = vsel %vm1550, %v1552, %v1548
    %v1554 = vmul.f32 1.0, %v1553
    %v1555 = vxor.u32 %v1533, 2147483648
    %v1556 = vmul.f32 %v1555, 1.442695
    %v1557 = vpow.pop %v1556
    %v1558 = vadd.f32 %v1557, 1.0
    %v1559 = vrcp.pop %v1558
    %v1560 = vmul.f32 %v1558, %v1559
    %v1561 = vsub.f32 1.0, %v1560
    %v1562 = vmul.f32 %v1559, %v1561
    %v1563 = vadd.f32 %v1559, %v1562
    %vm1564 = vweird.f32 %v1558
    %vm1565 = vweird.f32 %v1559
    %vm1566 = vmor %vm1564, %vm1565
    %v1567 = vsel %vm1566, %v1559, %v1563
    %v1568 = vand.u32 2147483647, %v1558
    %vm1569 = vcmp.eq.f32.partialorder %v1568, 8.507059e+37
    %v1570 = vand.u32 %v1558, 2147483648
    %v1571 = vor.u32 1.1754944e-38, %v1570
    %v1572 = vsel %vm1569, %v1571, %v1567
    %v1573 = vmul.f32 1.0, %v1572
    %v1574 = vtanh.pop %v1534
    %v1575 = vxor.u32 %v1535, 2147483648
    %v1576 = vmul.f32 %v1575, 1.442695
    %v1577 = vpow.pop %v1576
    %v1578 = vadd.f32 %v1577, 1.0
    %v1579 = vrcp.pop %v1578
    %v1580 = vmul.f32 %v1578, %v1579
    %v1581 = vsub.f32 1.0, %v1580
    %v1582 = vmul.f32 %v1579, %v1581
    %v1583 = vadd.f32 %v1579, %v1582
    %vm1584 = vweird.f32 %v1578
    %vm1585 = vweird.f32 %v1579
    %vm1586 = vmor %vm1584, %vm1585
    %v1587 = vsel %vm1586, %v1579, %v1583
    %v1588 = vand.u32 2147483647, %v1578
    %vm1589 = vcmp.eq.f32.partialorder %v1588, 8.507059e+37
    %v1590 = vand.u32 %v1578, 2147483648
    %v1591 = vor.u32 1.1754944e-38, %v1590
    %v1592 = vsel %vm1589, %v1591, %v1587
    %v1593 = vmul.f32 1.0, %v1592
    %v1594 = vmul.f32 %v1573, %v1469
    %v1595 = vmul.f32 %v1554, %v1574
    %v1596 = vadd.f32 %v1594, %v1595
    %v1597 = vtanh.pop %v1596
    %v1598 = vmul.f32 %v1593, %v1597
    %s1599 = scalar_lea.vmem [#allocation3], 48
    %1600 = vst [vmem:[%s1599] sm:$0xff] %v1598
    %s1601 = scalar_lea.vmem [#allocation2], 224
    %v1602 = vld [vmem:[%s1601] sm:$0xff]
    %v1603 = vld [vmem:[%s1601 + $0x8] sm:$0xff]
    %v1604 = vld [vmem:[%s1601 + $0x10] sm:$0xff]
    %v1605 = vld [vmem:[%s1601 + $0x18] sm:$0xff]
    %v1606 = vpack.c.bf16 %v1598, %v1598
    %1607 = vmatpush.bf16.msra.mxu0 %v683
    %1608 = vmatpush.bf16.msra.mxu0 %v679
    %1609 = vmatpush.bf16.msra.mxu0 %v675
    %1610 = vmatpush.bf16.msra.mxu0 %v671
    %1611 = vmatpush.bf16.msra.mxu0 %v667
    %1612 = vmatpush.bf16.msra.mxu0 %v663
    %1613 = vmatpush.bf16.msra.mxu0 %v659
    %1614 = vmatpush.bf16.msra.mxu0 %v655
    %1615 = vmatmul.bf16.gmra.mxu0 %v1606
    %v1616 = vpop.f32.mrf.mxu0
    %v1617 = vadd.f32 0.0, %v1616
    %v1618 = vpop.f32.mrf.mxu0
    %1619 = vdwg.mxu0
    %1620 = vmatpush.bf16.msra.mxu0 %v684
    %1621 = vmatpush.bf16.msra.mxu0 %v680
    %1622 = vmatpush.bf16.msra.mxu0 %v676
    %1623 = vmatpush.bf16.msra.mxu0 %v672
    %1624 = vmatpush.bf16.msra.mxu0 %v668
    %1625 = vmatpush.bf16.msra.mxu0 %v664
    %1626 = vmatpush.bf16.msra.mxu0 %v660
    %1627 = vmatpush.bf16.msra.mxu0 %v656
    %1628 = vmatmul.bf16.gmra.mxu0 %v1606
    %v1629 = vpop.f32.mrf.mxu0
    %v1630 = vadd.f32 0.0, %v1629
    %v1631 = vpop.f32.mrf.mxu0
    %1632 = vdwg.mxu0
    %1633 = vmatpush.bf16.msra.mxu0 %v685
    %1634 = vmatpush.bf16.msra.mxu0 %v681
    %1635 = vmatpush.bf16.msra.mxu0 %v677
    %1636 = vmatpush.bf16.msra.mxu0 %v673
    %1637 = vmatpush.bf16.msra.mxu0 %v669
    %1638 = vmatpush.bf16.msra.mxu0 %v665
    %1639 = vmatpush.bf16.msra.mxu0 %v661
    %1640 = vmatpush.bf16.msra.mxu0 %v657
    %1641 = vmatmul.bf16.gmra.mxu0 %v1606
    %v1642 = vpop.f32.mrf.mxu0
    %v1643 = vadd.f32 0.0, %v1642
    %v1644 = vpop.f32.mrf.mxu0
    %1645 = vdwg.mxu0
    %1646 = vmatpush.bf16.msra.mxu0 %v686
    %1647 = vmatpush.bf16.msra.mxu0 %v682
    %1648 = vmatpush.bf16.msra.mxu0 %v678
    %1649 = vmatpush.bf16.msra.mxu0 %v674
    %1650 = vmatpush.bf16.msra.mxu0 %v670
    %1651 = vmatpush.bf16.msra.mxu0 %v666
    %1652 = vmatpush.bf16.msra.mxu0 %v662
    %1653 = vmatpush.bf16.msra.mxu0 %v658
    %1654 = vmatmul.bf16.gmra.mxu0 %v1606
    %v1655 = vpop.f32.mrf.mxu0
    %v1656 = vadd.f32 0.0, %v1655
    %v1657 = vpop.f32.mrf.mxu0
    %1658 = vdwg.mxu0
    %v1659 = vadd.f32 %v1602, %v1617
    %v1660 = vadd.f32 %v1603, %v1630
    %v1661 = vadd.f32 %v1604, %v1643
    %v1662 = vadd.f32 %v1605, %v1656
    %v1663 = vxor.u32 %v1659, 2147483648
    %v1664 = vmul.f32 %v1663, 1.442695
    %v1665 = vpow.pop %v1664
    %v1666 = vadd.f32 %v1665, 1.0
    %v1667 = vrcp.pop %v1666
    %v1668 = vmul.f32 %v1666, %v1667
    %v1669 = vsub.f32 1.0, %v1668
    %v1670 = vmul.f32 %v1667, %v1669
    %v1671 = vadd.f32 %v1667, %v1670
    %vm1672 = vweird.f32 %v1666
    %vm1673 = vweird.f32 %v1667
    %vm1674 = vmor %vm1672, %vm1673
    %v1675 = vsel %vm1674, %v1667, %v1671
    %v1676 = vand.u32 2147483647, %v1666
    %vm1677 = vcmp.eq.f32.partialorder %v1676, 8.507059e+37
    %v1678 = vand.u32 %v1666, 2147483648
    %v1679 = vor.u32 1.1754944e-38, %v1678
    %v1680 = vsel %vm1677, %v1679, %v1675
    %v1681 = vmul.f32 1.0, %v1680
    %v1682 = vxor.u32 %v1660, 2147483648
    %v1683 = vmul.f32 %v1682, 1.442695
    %v1684 = vpow.pop %v1683
    %v1685 = vadd.f32 %v1684, 1.0
    %v1686 = vrcp.pop %v1685
    %v1687 = vmul.f32 %v1685, %v1686
    %v1688 = vsub.f32 1.0, %v1687
    %v1689 = vmul.f32 %v1686, %v1688
    %v1690 = vadd.f32 %v1686, %v1689
    %vm1691 = vweird.f32 %v1685
    %vm1692 = vweird.f32 %v1686
    %vm1693 = vmor %vm1691, %vm1692
    %v1694 = vsel %vm1693, %v1686, %v1690
    %v1695 = vand.u32 2147483647, %v1685
    %vm1696 = vcmp.eq.f32.partialorder %v1695, 8.507059e+37
    %v1697 = vand.u32 %v1685, 2147483648
    %v1698 = vor.u32 1.1754944e-38, %v1697
    %v1699 = vsel %vm1696, %v1698, %v1694
    %v1700 = vmul.f32 1.0, %v1699
    %v1701 = vtanh.pop %v1661
    %v1702 = vxor.u32 %v1662, 2147483648
    %v1703 = vmul.f32 %v1702, 1.442695
    %v1704 = vpow.pop %v1703
    %v1705 = vadd.f32 %v1704, 1.0
    %v1706 = vrcp.pop %v1705
    %v1707 = vmul.f32 %v1705, %v1706
    %v1708 = vsub.f32 1.0, %v1707
    %v1709 = vmul.f32 %v1706, %v1708
    %v1710 = vadd.f32 %v1706, %v1709
    %vm1711 = vweird.f32 %v1705
    %vm1712 = vweird.f32 %v1706
    %vm1713 = vmor %vm1711, %vm1712
    %v1714 = vsel %vm1713, %v1706, %v1710
    %v1715 = vand.u32 2147483647, %v1705
    %vm1716 = vcmp.eq.f32.partialorder %v1715, 8.507059e+37
    %v1717 = vand.u32 %v1705, 2147483648
    %v1718 = vor.u32 1.1754944e-38, %v1717
    %v1719 = vsel %vm1716, %v1718, %v1714
    %v1720 = vmul.f32 1.0, %v1719
    %v1721 = vmul.f32 %v1700, %v1596
    %v1722 = vmul.f32 %v1681, %v1701
    %v1723 = vadd.f32 %v1721, %v1722
    %v1724 = vtanh.pop %v1723
    %v1725 = vmul.f32 %v1720, %v1724
    %s1726 = scalar_lea.vmem [#allocation3], 56
    %1727 = vst [vmem:[%s1726] sm:$0xff] %v1725
    %v1728 = vld [vmem:[#allocation3] sm:$0xff]
    %v1729 = vld [vmem:[#allocation3 + $0x8] sm:$0xff]
    %v1730 = vld [vmem:[#allocation3 + $0x10] sm:$0xff]
    %v1731 = vld [vmem:[#allocation3 + $0x18] sm:$0xff]
    %v1732 = vld [vmem:[#allocation3 + $0x20] sm:$0xff]
    %v1733 = vld [vmem:[#allocation3 + $0x28] sm:$0xff]
    %v1734 = vld [vmem:[#allocation3 + $0x30] sm:$0xff]
    %v1735 = vld [vmem:[#allocation3 + $0x38] sm:$0xff]
    %v1736 = vpack.c.bf16 %v1729, %v1728
    %v1737 = vpack.c.bf16 %v1731, %v1730
    %v1738 = vpack.c.bf16 %v1733, %v1732
    %v1739 = vpack.c.bf16 %v1735, %v1734
    %v1740 = vld [vmem:[#allocation13] sm:$0xf]
    %v1741 = vld [vmem:[#allocation13 + $0x4] sm:$0xf]
    %v1742 = vld [vmem:[#allocation13 + $0x8] sm:$0xf]
    %v1743 = vld [vmem:[#allocation13 + $0xc] sm:$0xf]
    %v1744 = vld [vmem:[#allocation13 + $0x10] sm:$0xf]
    %v1745 = vld [vmem:[#allocation13 + $0x14] sm:$0xf]
    %v1746 = vld [vmem:[#allocation13 + $0x18] sm:$0xf]
    %v1747 = vld [vmem:[#allocation13 + $0x1c] sm:$0xf]
    %v1748 = vld [vmem:[#allocation13 + $0x20] sm:$0xf]
    %v1749 = vld [vmem:[#allocation13 + $0x24] sm:$0xf]
    %v1750 = vld [vmem:[#allocation13 + $0x28] sm:$0xf]
    %v1751 = vld [vmem:[#allocation13 + $0x2c] sm:$0xf]
    %v1752 = vld [vmem:[#allocation13 + $0x30] sm:$0xf]
    %v1753 = vld [vmem:[#allocation13 + $0x34] sm:$0xf]
    %v1754 = vld [vmem:[#allocation13 + $0x38] sm:$0xf]
    %v1755 = vld [vmem:[#allocation13 + $0x3c] sm:$0xf]
    %v1756 = vld [vmem:[%s6] sm:$0x1]
    %v1758 = vperm.slane %v1756, 0
    %v1776 = vunpack.c.l.b16 %v1740
    %v1777 = vunpack.c.l.b16 %v1741
    %v1778 = vunpack.c.l.b16 %v1742
    %v1779 = vunpack.c.l.b16 %v1743
    %v1780 = vunpack.c.l.b16 %v1744
    %v1781 = vunpack.c.l.b16 %v1745
    %v1782 = vunpack.c.l.b16 %v1746
    %v1783 = vunpack.c.l.b16 %v1747
    %v1784 = vunpack.c.l.b16 %v1748
    %v1785 = vunpack.c.l.b16 %v1749
    %v1786 = vunpack.c.l.b16 %v1750
    %v1787 = vunpack.c.l.b16 %v1751
    %v1788 = vunpack.c.l.b16 %v1752
    %v1789 = vunpack.c.l.b16 %v1753
    %v1790 = vunpack.c.l.b16 %v1754
    %v1791 = vunpack.c.l.b16 %v1755
    %v1792 = vpack.c.b16 %v1777, %v1776
    %v1793 = vpack.c.b16 %v1779, %v1778
    %v1794 = vpack.c.b16 %v1781, %v1780
    %v1795 = vpack.c.b16 %v1783, %v1782
    %v1796 = vpack.c.b16 %v1785, %v1784
    %v1797 = vpack.c.b16 %v1787, %v1786
    %v1798 = vpack.c.b16 %v1789, %v1788
    %v1799 = vpack.c.b16 %v1791, %v1790
    %1808 = vmatpush.bf16.msra.mxu0 %v1799
    %1809 = vmatpush.bf16.msra.mxu0 %v1798
    %1810 = vmatpush.bf16.msra.mxu0 %v1797
    %1811 = vmatpush.bf16.msra.mxu0 %v1796
    %1812 = vmatpush.bf16.msra.mxu0 %v1795
    %1813 = vmatpush.bf16.msra.mxu0 %v1794
    %1814 = vmatpush.bf16.msra.mxu0 %v1793
    %1815 = vmatpush.bf16.msra.mxu0 %v1792
    %1816 = vmatmul.bf16.gmra.mxu0 %v1736
    %v1817 = vpop.f32.mrf.mxu0
    %v1818 = vadd.f32 %v1758, %v1817
    %v1819 = vpop.f32.mrf.mxu0
    %v1820 = vadd.f32 %v1758, %v1819
    %1821 = vmatmul.bf16.gmra.mxu0 %v1737
    %v1822 = vpop.f32.mrf.mxu0
    %v1823 = vadd.f32 %v1758, %v1822
    %v1824 = vpop.f32.mrf.mxu0
    %v1825 = vadd.f32 %v1758, %v1824
    %1826 = vmatmul.bf16.gmra.mxu0 %v1738
    %v1827 = vpop.f32.mrf.mxu0
    %v1828 = vadd.f32 %v1758, %v1827
    %v1829 = vpop.f32.mrf.mxu0
    %v1830 = vadd.f32 %v1758, %v1829
    %1831 = vmatmul.bf16.gmra.mxu0 %v1739
    %v1832 = vpop.f32.mrf.mxu0
    %v1833 = vadd.f32 %v1758, %v1832
    %v1834 = vpop.f32.mrf.mxu0
    %v1835 = vadd.f32 %v1758, %v1834
    %1836 = vdwg.mxu0
    %1837 = vst [vmem:[#allocation4] sm:$0xff] %v1818
    %1838 = vst [vmem:[#allocation4 + $0x8] sm:$0xff] %v1820
    %1839 = vst [vmem:[#allocation4 + $0x10] sm:$0xff] %v1823
    %1840 = vst [vmem:[#allocation4 + $0x18] sm:$0xff] %v1825
    %1841 = vst [vmem:[#allocation4 + $0x20] sm:$0xff] %v1828
    %1842 = vst [vmem:[#allocation4 + $0x28] sm:$0xff] %v1830
    %1843 = vst [vmem:[#allocation4 + $0x30] sm:$0xff] %v1833
    %1844 = vst [vmem:[#allocation4 + $0x38] sm:$0xff] %v1835
    %v1845 = vld [vmem:[#allocation14] sm:$0xf]
    %v1846 = vld [vmem:[#allocation14 + $0x4] sm:$0xf]
    %v1847 = vld [vmem:[#allocation14 + $0x8] sm:$0xf]
    %v1848 = vld [vmem:[#allocation14 + $0xc] sm:$0xf]
    %v1849 = vld [vmem:[#allocation14 + $0x10] sm:$0xf]
    %v1850 = vld [vmem:[#allocation14 + $0x14] sm:$0xf]
    %v1851 = vld [vmem:[#allocation14 + $0x18] sm:$0xf]
    %v1852 = vld [vmem:[#allocation14 + $0x1c] sm:$0xf]
    %v1853 = vld [vmem:[#allocation14 + $0x20] sm:$0xf]
    %v1854 = vld [vmem:[#allocation14 + $0x24] sm:$0xf]
    %v1855 = vld [vmem:[#allocation14 + $0x28] sm:$0xf]
    %v1856 = vld [vmem:[#allocation14 + $0x2c] sm:$0xf]
    %v1857 = vld [vmem:[#allocation14 + $0x30] sm:$0xf]
    %v1858 = vld [vmem:[#allocation14 + $0x34] sm:$0xf]
    %v1859 = vld [vmem:[#allocation14 + $0x38] sm:$0xf]
    %v1860 = vld [vmem:[#allocation14 + $0x3c] sm:$0xf]
    %v1861 = vld [vmem:[#allocation4] sm:$0xff]
    %v1878 = vunpack.c.l.b16 %v1845
    %v1879 = vunpack.c.l.b16 %v1846
    %v1880 = vunpack.c.l.b16 %v1847
    %v1881 = vunpack.c.l.b16 %v1848
    %v1882 = vunpack.c.l.b16 %v1849
    %v1883 = vunpack.c.l.b16 %v1850
    %v1884 = vunpack.c.l.b16 %v1851
    %v1885 = vunpack.c.l.b16 %v1852
    %v1886 = vunpack.c.l.b16 %v1853
    %v1887 = vunpack.c.l.b16 %v1854
    %v1888 = vunpack.c.l.b16 %v1855
    %v1889 = vunpack.c.l.b16 %v1856
    %v1890 = vunpack.c.l.b16 %v1857
    %v1891 = vunpack.c.l.b16 %v1858
    %v1892 = vunpack.c.l.b16 %v1859
    %v1893 = vunpack.c.l.b16 %v1860
    %v1894 = vpack.c.b16 %v1879, %v1878
    %v1895 = vpack.c.b16 %v1881, %v1880
    %v1896 = vpack.c.b16 %v1883, %v1882
    %v1897 = vpack.c.b16 %v1885, %v1884
    %v1898 = vpack.c.b16 %v1887, %v1886
    %v1899 = vpack.c.b16 %v1889, %v1888
    %v1900 = vpack.c.b16 %v1891, %v1890
    %v1901 = vpack.c.b16 %v1893, %v1892
    %1910 = vmatpush.bf16.msra.mxu0 %v1901
    %1911 = vmatpush.bf16.msra.mxu0 %v1900
    %1912 = vmatpush.bf16.msra.mxu0 %v1899
    %1913 = vmatpush.bf16.msra.mxu0 %v1898
    %1914 = vmatpush.bf16.msra.mxu0 %v1897
    %1915 = vmatpush.bf16.msra.mxu0 %v1896
    %1916 = vmatpush.bf16.msra.mxu0 %v1895
    %1917 = vmatpush.bf16.msra.mxu0 %v1894
    %1918 = vmatmul.bf16.gmra.mxu0 0
    %v1919 = vpop.f32.mrf.mxu0
    %v1920 = vadd.f32 0.0, %v1919
    %v1921 = vpop.f32.mrf.mxu0
    %1922 = vdwg.mxu0
    %v1923 = vadd.f32 %v1861, %v1920
    %v1924 = vtanh.pop %v1923
    %s1925 = scalar_lea.vmem [#allocation4], 8
    %v1926 = vld [vmem:[%s1925] sm:$0xff]
    %v1927 = vpack.c.bf16 %v1924, %v1924
    %1928 = vmatpush.bf16.msra.mxu0 %v1901
    %1929 = vmatpush.bf16.msra.mxu0 %v1900
    %1930 = vmatpush.bf16.msra.mxu0 %v1899
    %1931 = vmatpush.bf16.msra.mxu0 %v1898
    %1932 = vmatpush.bf16.msra.mxu0 %v1897
    %1933 = vmatpush.bf16.msra.mxu0 %v1896
    %1934 = vmatpush.bf16.msra.mxu0 %v1895
    %1935 = vmatpush.bf16.msra.mxu0 %v1894
    %1936 = vmatmul.bf16.gmra.mxu0 %v1927
    %v1937 = vpop.f32.mrf.mxu0
    %v1938 = vadd.f32 0.0, %v1937
    %v1939 = vpop.f32.mrf.mxu0
    %1940 = vdwg.mxu0
    %v1941 = vadd.f32 %v1926, %v1938
    %v1942 = vtanh.pop %v1941
    %s1943 = scalar_lea.vmem [#allocation4], 16
    %v1944 = vld [vmem:[%s1943] sm:$0xff]
    %v1945 = vpack.c.bf16 %v1942, %v1942
    %1946 = vmatpush.bf16.msra.mxu0 %v1901
    %1947 = vmatpush.bf16.msra.mxu0 %v1900
    %1948 = vmatpush.bf16.msra.mxu0 %v1899
    %1949 = vmatpush.bf16.msra.mxu0 %v1898
    %1950 = vmatpush.bf16.msra.mxu0 %v1897
    %1951 = vmatpush.bf16.msra.mxu0 %v1896
    %1952 = vmatpush.bf16.msra.mxu0 %v1895
    %1953 = vmatpush.bf16.msra.mxu0 %v1894
    %1954 = vmatmul.bf16.gmra.mxu0 %v1945
    %v1955 = vpop.f32.mrf.mxu0
    %v1956 = vadd.f32 0.0, %v1955
    %v1957 = vpop.f32.mrf.mxu0
    %1958 = vdwg.mxu0
    %v1959 = vadd.f32 %v1944, %v1956
    %v1960 = vtanh.pop %v1959
    %s1961 = scalar_lea.vmem [#allocation4], 24
    %v1962 = vld [vmem:[%s1961] sm:$0xff]
    %v1963 = vpack.c.bf16 %v1960, %v1960
    %1964 = vmatpush.bf16.msra.mxu0 %v1901
    %1965 = vmatpush.bf16.msra.mxu0 %v1900
    %1966 = vmatpush.bf16.msra.mxu0 %v1899
    %1967 = vmatpush.bf16.msra.mxu0 %v1898
    %1968 = vmatpush.bf16.msra.mxu0 %v1897
    %1969 = vmatpush.bf16.msra.mxu0 %v1896
    %1970 = vmatpush.bf16.msra.mxu0 %v1895
    %1971 = vmatpush.bf16.msra.mxu0 %v1894
    %1972 = vmatmul.bf16.gmra.mxu0 %v1963
    %v1973 = vpop.f32.mrf.mxu0
    %v1974 = vadd.f32 0.0, %v1973
    %v1975 = vpop.f32.mrf.mxu0
    %1976 = vdwg.mxu0
    %v1977 = vadd.f32 %v1962, %v1974
    %v1978 = vtanh.pop %v1977
    %s1979 = scalar_lea.vmem [#allocation4], 32
    %v1980 = vld [vmem:[%s1979] sm:$0xff]
    %v1981 = vpack.c.bf16 %v1978, %v1978
    %1982 = vmatpush.bf16.msra.mxu0 %v1901
    %1983 = vmatpush.bf16.msra.mxu0 %v1900
    %1984 = vmatpush.bf16.msra.mxu0 %v1899
    %1985 = vmatpush.bf16.msra.mxu0 %v1898
    %1986 = vmatpush.bf16.msra.mxu0 %v1897
    %1987 = vmatpush.bf16.msra.mxu0 %v1896
    %1988 = vmatpush.bf16.msra.mxu0 %v1895
    %1989 = vmatpush.bf16.msra.mxu0 %v1894
    %1990 = vmatmul.bf16.gmra.mxu0 %v1981
    %v1991 = vpop.f32.mrf.mxu0
    %v1992 = vadd.f32 0.0, %v1991
    %v1993 = vpop.f32.mrf.mxu0
    %1994 = vdwg.mxu0
    %v1995 = vadd.f32 %v1980, %v1992
    %v1996 = vtanh.pop %v1995
    %s1997 = scalar_lea.vmem [#allocation4], 40
    %v1998 = vld [vmem:[%s1997] sm:$0xff]
    %v1999 = vpack.c.bf16 %v1996, %v1996
    %2000 = vmatpush.bf16.msra.mxu0 %v1901
    %2001 = vmatpush.bf16.msra.mxu0 %v1900
    %2002 = vmatpush.bf16.msra.mxu0 %v1899
    %2003 = vmatpush.bf16.msra.mxu0 %v1898
    %2004 = vmatpush.bf16.msra.mxu0 %v1897
    %2005 = vmatpush.bf16.msra.mxu0 %v1896
    %2006 = vmatpush.bf16.msra.mxu0 %v1895
    %2007 = vmatpush.bf16.msra.mxu0 %v1894
    %2008 = vmatmul.bf16.gmra.mxu0 %v1999
    %v2009 = vpop.f32.mrf.mxu0
    %v2010 = vadd.f32 0.0, %v2009
    %v2011 = vpop.f32.mrf.mxu0
    %2012 = vdwg.mxu0
    %v2013 = vadd.f32 %v1998, %v2010
    %v2014 = vtanh.pop %v2013
    %s2015 = scalar_lea.vmem [#allocation4], 48
    %v2016 = vld [vmem:[%s2015] sm:$0xff]
    %v2017 = vpack.c.bf16 %v2014, %v2014
    %2018 = vmatpush.bf16.msra.mxu0 %v1901
    %2019 = vmatpush.bf16.msra.mxu0 %v1900
    %2020 = vmatpush.bf16.msra.mxu0 %v1899
    %2021 = vmatpush.bf16.msra.mxu0 %v1898
    %2022 = vmatpush.bf16.msra.mxu0 %v1897
    %2023 = vmatpush.bf16.msra.mxu0 %v1896
    %2024 = vmatpush.bf16.msra.mxu0 %v1895
    %2025 = vmatpush.bf16.msra.mxu0 %v1894
    %2026 = vmatmul.bf16.gmra.mxu0 %v2017
    %v2027 = vpop.f32.mrf.mxu0
    %v2028 = vadd.f32 0.0, %v2027
    %v2029 = vpop.f32.mrf.mxu0
    %2030 = vdwg.mxu0
    %v2031 = vadd.f32 %v2016, %v2028
    %v2032 = vtanh.pop %v2031
    %s2033 = scalar_lea.vmem [#allocation4], 56
    %v2034 = vld [vmem:[%s2033] sm:$0xff]
    %v2035 = vpack.c.bf16 %v2032, %v2032
    %2036 = vmatpush.bf16.msra.mxu0 %v1901
    %2037 = vmatpush.bf16.msra.mxu0 %v1900
    %2038 = vmatpush.bf16.msra.mxu0 %v1899
    %2039 = vmatpush.bf16.msra.mxu0 %v1898
    %2040 = vmatpush.bf16.msra.mxu0 %v1897
    %2041 = vmatpush.bf16.msra.mxu0 %v1896
    %2042 = vmatpush.bf16.msra.mxu0 %v1895
    %2043 = vmatpush.bf16.msra.mxu0 %v1894
    %2044 = vmatmul.bf16.gmra.mxu0 %v2035
    %v2045 = vpop.f32.mrf.mxu0
    %v2046 = vadd.f32 0.0, %v2045
    %v2047 = vpop.f32.mrf.mxu0
    %2048 = vdwg.mxu0
    %v2049 = vadd.f32 %v2034, %v2046
    %v2050 = vtanh.pop %v2049
    %v2051 = vpack.c.bf16 %v2050, %v2050
    %v2052 = vld [vmem:[#allocation16] sm:$0xf]
    %v2053 = vld [vmem:[#allocation16 + $0x4] sm:$0xf]
    %v2054 = vld [vmem:[#allocation16 + $0x8] sm:$0xf]
    %v2055 = vld [vmem:[#allocation16 + $0xc] sm:$0xf]
    %v2056 = vld [vmem:[#allocation16 + $0x10] sm:$0xf]
    %v2057 = vld [vmem:[#allocation16 + $0x14] sm:$0xf]
    %v2058 = vld [vmem:[#allocation16 + $0x18] sm:$0xf]
    %v2059 = vld [vmem:[#allocation16 + $0x1c] sm:$0xf]
    %v2060 = vld [vmem:[#allocation16 + $0x20] sm:$0xf]
    %v2061 = vld [vmem:[#allocation16 + $0x24] sm:$0xf]
    %v2062 = vld [vmem:[#allocation16 + $0x28] sm:$0xf]
    %v2063 = vld [vmem:[#allocation16 + $0x2c] sm:$0xf]
    %v2064 = vld [vmem:[#allocation16 + $0x30] sm:$0xf]
    %v2065 = vld [vmem:[#allocation16 + $0x34] sm:$0xf]
    %v2066 = vld [vmem:[#allocation16 + $0x38] sm:$0xf]
    %v2067 = vld [vmem:[#allocation16 + $0x3c] sm:$0xf]
    %v2068 = vld [vmem:[%s8] sm:$0x1]
    %v2070 = vperm.slane %v2068, 0
    %v2088 = vunpack.c.l.b16 %v2052
    %v2089 = vunpack.c.l.b16 %v2053
    %v2090 = vunpack.c.l.b16 %v2054
    %v2091 = vunpack.c.l.b16 %v2055
    %v2092 = vunpack.c.l.b16 %v2056
    %v2093 = vunpack.c.l.b16 %v2057
    %v2094 = vunpack.c.l.b16 %v2058
    %v2095 = vunpack.c.l.b16 %v2059
    %v2096 = vunpack.c.l.b16 %v2060
    %v2097 = vunpack.c.l.b16 %v2061
    %v2098 = vunpack.c.l.b16 %v2062
    %v2099 = vunpack.c.l.b16 %v2063
    %v2100 = vunpack.c.l.b16 %v2064
    %v2101 = vunpack.c.l.b16 %v2065
    %v2102 = vunpack.c.l.b16 %v2066
    %v2103 = vunpack.c.l.b16 %v2067
    %v2104 = vpack.c.b16 %v2089, %v2088
    %v2105 = vpack.c.b16 %v2091, %v2090
    %v2106 = vpack.c.b16 %v2093, %v2092
    %v2107 = vpack.c.b16 %v2095, %v2094
    %v2108 = vpack.c.b16 %v2097, %v2096
    %v2109 = vpack.c.b16 %v2099, %v2098
    %v2110 = vpack.c.b16 %v2101, %v2100
    %v2111 = vpack.c.b16 %v2103, %v2102
    %2120 = vmatpush.bf16.msra.mxu0 %v2111
    %2121 = vmatpush.bf16.msra.mxu0 %v2110
    %2122 = vmatpush.bf16.msra.mxu0 %v2109
    %2123 = vmatpush.bf16.msra.mxu0 %v2108
    %2124 = vmatpush.bf16.msra.mxu0 %v2107
    %2125 = vmatpush.bf16.msra.mxu0 %v2106
    %2126 = vmatpush.bf16.msra.mxu0 %v2105
    %2127 = vmatpush.bf16.msra.mxu0 %v2104
    %2128 = vmatmul.bf16.gmra.mxu0 %v2051
    %v2129 = vpop.f32.mrf.mxu0
    %v2130 = vadd.f32 %v2070, %v2129
    %v2131 = vpop.f32.mrf.mxu0
    %2132 = vdwg.mxu0
    %v2133 = vxor.u32 %v2130, 2147483648
    %v2134 = vmul.f32 %v2133, 1.442695
    %v2135 = vpow.pop %v2134
    %v2136 = vadd.f32 %v2135, 1.0
    %v2137 = vrcp.pop %v2136
    %v2138 = vmul.f32 %v2136, %v2137
    %v2139 = vsub.f32 1.0, %v2138
    %v2140 = vmul.f32 %v2137, %v2139
    %v2141 = vadd.f32 %v2137, %v2140
    %vm2142 = vweird.f32 %v2136
    %vm2143 = vweird.f32 %v2137
    %vm2144 = vmor %vm2142, %vm2143
    %v2145 = vsel %vm2144, %v2137, %v2141
    %v2146 = vand.u32 2147483647, %v2136
    %vm2147 = vcmp.eq.f32.partialorder %v2146, 8.507059e+37
    %v2148 = vand.u32 %v2136, 2147483648
    %v2149 = vor.u32 1.1754944e-38, %v2148
    %v2150 = vsel %vm2147, %v2149, %v2145
    %v2151 = vmul.f32 1.0, %v2150
    %2152 = vst [vmem:[#allocation17] sm:$0xff] %v2151
    // Predicated region
    $region66: #{tpu_custom_call.1} parent=1 // pred_check
      _
    $region67: #{tpu_custom_call.1} parent=1 // pred_check_branch
      %2154 = sbr.rel (0) target = $region69
    $region68: #{tpu_custom_call.1} parent=1 // pred_region
      %2156 = vsyncadd [#allocation7], 0
      %s2158 = sshll.u32 [#allocation17], 4
      %s2159 = int_to_ptr.vmem [resolvable:$true] %s2158
      %s2160 = sshll.u32 %s9, 4
      %s2161 = int_to_ptr.hbm [resolvable:$true] %s2160
      %2163 = dma.vmem_to_hbm [thread:$0]  %s2159, 128, %s2161, [#allocation7]
    $region69: #{tpu_custom_call.1} parent=1 // pred_fallthru
      _
    // Predicated region
    $region70: #{tpu_custom_call.1} parent=1 // pred_check
      _
    $region71: #{tpu_custom_call.1} parent=1 // pred_check_branch
      %2165 = sbr.rel (0) target = $region73
    $region72: #{tpu_custom_call.1} parent=1 // pred_region
      %2167 = dma.done [#allocation7], 128
    $region73: #{tpu_custom_call.1} parent=1 // pred_fallthru
      _
    %2168 = vsyncpa [#allocation6], 1
    %2169 = vsyncpa [#allocation9], 1
    %2170 = vsyncpa [#allocation12], 1
    %2171 = vsyncpa [#allocation15], 1
    %2172 = vsyncpa [#allocation7], 1

</llo_original>
